<compile_context>
chip_gen: v7x
topology: tpu7x:2x2x1
jax: 0.10.0
libtpu: 0.0.40
codegen_flags: <defaults>
</compile_context>

<pallas_src>
import functools

import jax
import jax.numpy as jnp
import numpy as np
from jax.experimental import pallas as pl
from jax.experimental.pallas import tpu as pltpu


def _round_up(x, m):
    return (x + m - 1) // m * m


def encoder_gru_kernel(x_ref, lens_ref, wih_ref, bih_ref, whh_ref, bhh_ref,
                       out_ref, gi_ref):
    # x_ref   : (T*Bp, E)   bf16   time-major embedded tokens (flattened)
    # lens_ref: (Bp, 1)     int32  text_lengths - 1 (clamped)
    # wih_ref : (E, 3*Hp)   bf16   fused input->gates weights (gate order r,z,n)
    # bih_ref : (1, 3*Hp)   f32
    # whh_ref : (Hp, 3*Hp)  bf16   fused hidden->gates weights
    # bhh_ref : (1, 3*Hp)   f32
    # out_ref : (Bp, Hp)    f32    hidden state at last valid timestep
    # gi_ref  : (T*Bp, 3*Hp) f32   VMEM scratch: precomputed input gates
    TB, _ = x_ref.shape
    Bp, Hp = out_ref.shape
    T = TB // Bp

    # (1) Hoisted input projection for ALL timesteps: one large bf16 MXU matmul,
    #     bias folded in, result resident in VMEM scratch for the recurrence.
    gi_ref[...] = (
        jnp.dot(x_ref[...], wih_ref[...], preferred_element_type=jnp.float32)
        + bih_ref[...]
    )

    # Loaded once (not per step).
    lens_m1 = lens_ref[...]          # (Bp, 1) int32
    whh = whh_ref[...]               # (Hp, 3Hp) bf16, resident across the loop
    bhh = bhh_ref[...]               # (1, 3Hp) f32

    def step(t, carry):
        h, sel = carry               # both (Bp, Hp) f32
        gi = gi_ref[pl.ds(t * Bp, Bp), :]                       # (Bp, 3Hp) f32
        gh = jnp.dot(h.astype(jnp.bfloat16), whh,
                     preferred_element_type=jnp.float32) + bhh  # (Bp, 3Hp) f32

        # PyTorch GRU gate order: r, z, n (f32 gate math).
        i_r, i_z, i_n = gi[:, :Hp], gi[:, Hp:2 * Hp], gi[:, 2 * Hp:]
        h_r, h_z, h_n = gh[:, :Hp], gh[:, Hp:2 * Hp], gh[:, 2 * Hp:]
        r = jax.nn.sigmoid(i_r + h_r)
        z = jax.nn.sigmoid(i_z + h_z)
        n = jnp.tanh(i_n + r * h_n)
        h_new = (1.0 - z) * n + z * h

        # Capture hidden state exactly at the last valid timestep per batch row
        # (emulates pack_padded_sequence + gather(length-1)).
        sel = jnp.where(lens_m1 == t, h_new, sel)
        return h_new, sel

    h0 = jnp.zeros((Bp, Hp), jnp.float32)
    _, sel = jax.lax.fori_loop(0, T, step, (h0, h0), unroll=True)
    out_ref[...] = sel               # single lane-dense store


def _fuse_and_pad_params(params, Hp):
    """Fuse per-gate (r,z,n) weights along the lane axis and zero-pad H -> Hp."""
    H = params["whh"].shape[-1]

    def fuse_cols(w):                # (3, X, H) -> (X, 3*Hp)
        w = jnp.pad(w, ((0, 0), (0, 0), (0, Hp - H)))
        return jnp.concatenate([w[0], w[1], w[2]], axis=-1)

    wih_f = fuse_cols(params["wih"]).astype(jnp.bfloat16)            # (E, 3Hp)
    whh_p = jnp.pad(params["whh"], ((0, 0), (0, Hp - H), (0, 0)))    # pad rows
    whh_f = fuse_cols(whh_p).astype(jnp.bfloat16)                    # (Hp, 3Hp)
    bih_f = fuse_cols(params["bih"]).astype(jnp.float32)             # (1, 3Hp)
    bhh_f = fuse_cols(params["bhh"]).astype(jnp.float32)             # (1, 3Hp)
    return wih_f, whh_f, bih_f, bhh_f


@jax.jit
def encoder_rnn_forward(texts, text_lengths, params):
    B, T = texts.shape
    E = params["embedding"].shape[1]
    H = params["whh"].shape[-1]
    Bp = _round_up(B, 8)             # sublane-aligned batch
    Hp = _round_up(H, 128)           # lane-dense hidden

    # Glue: embedding lookup (gather) + bf16 cast + batch pad + time-major flatten.
    # TODO(synk): the token-id gather stays in XLA; a Pallas DMA-gather is overkill
    # at this vocab/embedding size.
    emb = params["embedding"][texts].astype(jnp.bfloat16)            # (B, T, E)
    emb = jnp.pad(emb, ((0, Bp - B), (0, 0), (0, 0)))                # (Bp, T, E)
    x = jnp.transpose(emb, (1, 0, 2)).reshape(T * Bp, E)             # (T*Bp, E)

    lens = jnp.clip(text_lengths.astype(jnp.int32), 1, T)            # guard OOB lens
    lens_m1 = jnp.pad((lens - 1).reshape(B, 1), ((0, Bp - B), (0, 0)))

    wih_f, whh_f, bih_f, bhh_f = _fuse_and_pad_params(params, Hp)

    out = pl.pallas_call(
        encoder_gru_kernel,
        out_shape=jax.ShapeDtypeStruct((Bp, Hp), jnp.float32),
        grid_spec=pltpu.PrefetchScalarGridSpec(
            num_scalar_prefetch=0,
            grid=(1,),  # whole recurrence lives inside one grid step
            in_specs=[
                pl.BlockSpec((T * Bp, E), lambda i: (0, 0)),        # x
                pl.BlockSpec((Bp, 1), lambda i: (0, 0)),            # lengths-1
                pl.BlockSpec((E, 3 * Hp), lambda i: (0, 0)),        # W_ih fused
                pl.BlockSpec((1, 3 * Hp), lambda i: (0, 0)),        # b_ih fused
                pl.BlockSpec((Hp, 3 * Hp), lambda i: (0, 0)),       # W_hh fused
                pl.BlockSpec((1, 3 * Hp), lambda i: (0, 0)),        # b_hh fused
            ],
            out_specs=pl.BlockSpec((Bp, Hp), lambda i: (0, 0)),
            scratch_shapes=[pltpu.VMEM((T * Bp, 3 * Hp), jnp.float32)],
        ),
        compiler_params=pltpu.CompilerParams(
            dimension_semantics=("arbitrary",)),
        # TODO(synk): at realistic batch sizes add a batch-split "parallel" grid
        # axis so v7x's two TensorCores each take half the batch.
    )(x, lens_m1, wih_f, bih_f, whh_f, bhh_f)

    return out[:B, :H]


def reference_forward(texts, text_lengths, params):
    # Pure-JAX f32 reference of the same semantics (full GRU + gather at len-1).
    emb = params["embedding"][texts].astype(jnp.float32)             # (B, T, E)
    B, T, E = emb.shape
    H = params["whh"].shape[-1]

    def step(h, x_t):
        gi = jnp.einsum("be,geh->gbh", x_t, params["wih"]) + params["bih"]
        gh = jnp.einsum("bh,ghk->gbk", h, params["whh"]) + params["bhh"]
        r = jax.nn.sigmoid(gi[0] + gh[0])
        z = jax.nn.sigmoid(gi[1] + gh[1])
        n = jnp.tanh(gi[2] + r * gh[2])
        h_new = (1.0 - z) * n + z * h
        return h_new, h_new

    h0 = jnp.zeros((B, H), jnp.float32)
    _, hs = jax.lax.scan(step, h0, jnp.transpose(emb, (1, 0, 2)))    # (T, B, H)
    hs = jnp.transpose(hs, (1, 0, 2))                                # (B, T, H)
    idx = (text_lengths - 1).astype(jnp.int32)
    return hs[jnp.arange(B), idx]                                    # (B, H)


def init_params(key, input_size, embed_size, hidden_size):
    k_emb, k_wih, k_whh, k_bih, k_bhh = jax.random.split(key, 5)
    bound = 1.0 / np.sqrt(hidden_size)
    return {
        # nn.Embedding default init: N(0, 1)
        "embedding": jax.random.normal(
            k_emb, (input_size, embed_size), jnp.float32),
        # nn.GRU default init: U(-1/sqrt(H), 1/sqrt(H)); gate order (r, z, n)
        "wih": jax.random.uniform(
            k_wih, (3, embed_size, hidden_size), jnp.float32, -bound, bound),
        "whh": jax.random.uniform(
            k_whh, (3, hidden_size, hidden_size), jnp.float32, -bound, bound),
        "bih": jax.random.uniform(
            k_bih, (3, 1, hidden_size), jnp.float32, -bound, bound),
        "bhh": jax.random.uniform(
            k_bhh, (3, 1, hidden_size), jnp.float32, -bound, bound),
    }


if __name__ == "__main__":
    input_size = 50     # vocab
    embed_size = 32
    hidden_size = 32
    batch = 4
    seq = 8

    key = jax.random.PRNGKey(0)
    k_params, k_tok, k_len = jax.random.split(key, 3)

    params = init_params(k_params, input_size, embed_size, hidden_size)
    texts = jax.random.randint(k_tok, (batch, seq), 0, input_size, jnp.int32)
    text_lengths = jax.random.randint(k_len, (batch,), 1, seq + 1, jnp.int32)

    out = jax.block_until_ready(encoder_rnn_forward(texts, text_lengths, params))
    ref = jax.block_until_ready(reference_forward(texts, text_lengths, params))

    # bf16 MXU inputs (f32 accumulate / gate math) => relaxed tolerance vs f32 ref.
    np.testing.assert_allclose(np.asarray(out), np.asarray(ref),
                               rtol=2e-2, atol=2e-2)

    print("KERNEL_OK")
</pallas_src>

<mosaic_0001>
module attributes {stable_mosaic.version = 11 : i64} {
  func.func @encoder_gru_kernel(%arg0: i32, %arg1: memref<64x32xbf16, #tpu.memory_space<vmem>>, %arg2: memref<8x1xi32, #tpu.memory_space<vmem>>, %arg3: memref<32x384xbf16, #tpu.memory_space<vmem>>, %arg4: memref<1x384xf32, #tpu.memory_space<vmem>>, %arg5: memref<128x384xbf16, #tpu.memory_space<vmem>>, %arg6: memref<1x384xf32, #tpu.memory_space<vmem>>, %arg7: memref<8x128xf32, #tpu.memory_space<vmem>>, %arg8: memref<64x384xf32, #tpu.memory_space<vmem>>) attributes {dimension_semantics = [#tpu.dimension_semantics<arbitrary>], iteration_bounds = array<i64: 1>, scalar_prefetch = 0 : i64, scratch_operands = 1 : i64, tpu.core_type = #tpu.core_type<tc>, window_params = [{pipeline_mode = #tpu.pipeline_mode<synchronous>, transform_indices = @transform_0, window_bounds = array<i64: 64, 32>}, {pipeline_mode = #tpu.pipeline_mode<synchronous>, transform_indices = @transform_1, window_bounds = array<i64: 8, 1>}, {pipeline_mode = #tpu.pipeline_mode<synchronous>, transform_indices = @transform_2, window_bounds = array<i64: 32, 384>}, {pipeline_mode = #tpu.pipeline_mode<synchronous>, transform_indices = @transform_3, window_bounds = array<i64: 1, 384>}, {pipeline_mode = #tpu.pipeline_mode<synchronous>, transform_indices = @transform_4, window_bounds = array<i64: 128, 384>}, {pipeline_mode = #tpu.pipeline_mode<synchronous>, transform_indices = @transform_5, window_bounds = array<i64: 1, 384>}, {pipeline_mode = #tpu.pipeline_mode<synchronous>, transform_indices = @transform_6, window_bounds = array<i64: 8, 128>}]} {
    %c0 = arith.constant 0 : index
    %c0_0 = arith.constant 0 : index
    %0 = vector.load %arg1[%c0, %c0_0] : memref<64x32xbf16, #tpu.memory_space<vmem>>, vector<64x32xbf16>
    %c0_1 = arith.constant 0 : index
    %c0_2 = arith.constant 0 : index
    %1 = vector.load %arg3[%c0_1, %c0_2] : memref<32x384xbf16, #tpu.memory_space<vmem>>, vector<32x384xbf16>
    %cst = arith.constant dense<0.000000e+00> : vector<64x384xf32>
    %2 = tpu.matmul %0, %1, %cst {dimension_numbers = #tpu.dot_dimension_numbers<[1], [0], [0], [1], [0, 0, 1, 1], [], []>} : vector<64x32xbf16>, vector<32x384xbf16>, vector<64x384xf32> -> vector<64x384xf32>
    %c0_3 = arith.constant 0 : index
    %c0_4 = arith.constant 0 : index
    %3 = vector.load %arg4[%c0_3, %c0_4] : memref<1x384xf32, #tpu.memory_space<vmem>>, vector<1x384xf32>
    %4 = vector.broadcast %3 : vector<1x384xf32> to vector<64x384xf32>
    %5 = arith.addf %2, %4 : vector<64x384xf32>
    %c0_5 = arith.constant 0 : index
    %c0_6 = arith.constant 0 : index
    %6 = vector.load %arg8[%c0_5, %c0_6] : memref<64x384xf32, #tpu.memory_space<vmem>>, vector<64x384xf32>
    tpu.vector_store %arg8[%c0_5, %c0_6], %5 {strides = array<i32>} : memref<64x384xf32, #tpu.memory_space<vmem>>, vector<64x384xf32>,
    %c0_7 = arith.constant 0 : index
    %c0_8 = arith.constant 0 : index
    %7 = vector.load %arg2[%c0_7, %c0_8] : memref<8x1xi32, #tpu.memory_space<vmem>>, vector<8x1xi32>
    %c0_9 = arith.constant 0 : index
    %c0_10 = arith.constant 0 : index
    %8 = vector.load %arg5[%c0_9, %c0_10] : memref<128x384xbf16, #tpu.memory_space<vmem>>, vector<128x384xbf16>
    %c0_11 = arith.constant 0 : index
    %c0_12 = arith.constant 0 : index
    %9 = vector.load %arg6[%c0_11, %c0_12] : memref<1x384xf32, #tpu.memory_space<vmem>>, vector<1x384xf32>
    %cst_13 = arith.constant 0.000000e+00 : f32
    %10 = vector.broadcast %cst_13 : f32 to vector<8x128xf32>
    %c0_i32 = arith.constant 0 : i32
    %c8_i32 = arith.constant 8 : i32
    %11 = arith.muli %c0_i32, %c8_i32 : i32
    %12 = arith.index_cast %11 : i32 to index
    %c0_14 = arith.constant 0 : index
    %13 = vector.load %arg8[%12, %c0_14] : memref<64x384xf32, #tpu.memory_space<vmem>>, vector<8x384xf32>
    %14 = arith.truncf %10 : vector<8x128xf32> to vector<8x128xbf16>
    %cst_15 = arith.constant dense<0.000000e+00> : vector<8x384xf32>
    %15 = tpu.matmul %14, %8, %cst_15 {dimension_numbers = #tpu.dot_dimension_numbers<[1], [0], [0], [1], [0, 0, 1, 1], [], []>} : vector<8x128xbf16>, vector<128x384xbf16>, vector<8x384xf32> -> vector<8x384xf32>
    %16 = vector.broadcast %9 : vector<1x384xf32> to vector<8x384xf32>
    %17 = arith.addf %15, %16 : vector<8x384xf32>
    %18 = vector.extract_strided_slice %13 {offsets = [0, 0], sizes = [8, 128], strides = [1, 1]} : vector<8x384xf32> to vector<8x128xf32>
    %19 = vector.extract_strided_slice %13 {offsets = [0, 128], sizes = [8, 128], strides = [1, 1]} : vector<8x384xf32> to vector<8x128xf32>
    %20 = vector.extract_strided_slice %13 {offsets = [0, 256], sizes = [8, 128], strides = [1, 1]} : vector<8x384xf32> to vector<8x128xf32>
    %21 = vector.extract_strided_slice %17 {offsets = [0, 0], sizes = [8, 128], strides = [1, 1]} : vector<8x384xf32> to vector<8x128xf32>
    %22 = vector.extract_strided_slice %17 {offsets = [0, 128], sizes = [8, 128], strides = [1, 1]} : vector<8x384xf32> to vector<8x128xf32>
    %23 = vector.extract_strided_slice %17 {offsets = [0, 256], sizes = [8, 128], strides = [1, 1]} : vector<8x384xf32> to vector<8x128xf32>
    %24 = arith.addf %18, %21 : vector<8x128xf32>
    %25 = arith.negf %24 : vector<8x128xf32>
    %26 = math.exp %25 : vector<8x128xf32>
    %cst_16 = arith.constant 1.000000e+00 : f32
    %27 = vector.broadcast %cst_16 : f32 to vector<8x128xf32>
    %28 = arith.addf %27, %26 : vector<8x128xf32>
    %29 = arith.divf %27, %28 : vector<8x128xf32>
    %30 = arith.addf %19, %22 : vector<8x128xf32>
    %31 = arith.negf %30 : vector<8x128xf32>
    %32 = math.exp %31 : vector<8x128xf32>
    %cst_17 = arith.constant 1.000000e+00 : f32
    %33 = vector.broadcast %cst_17 : f32 to vector<8x128xf32>
    %34 = arith.addf %33, %32 : vector<8x128xf32>
    %35 = arith.divf %33, %34 : vector<8x128xf32>
    %36 = arith.mulf %29, %23 : vector<8x128xf32>
    %37 = arith.addf %20, %36 : vector<8x128xf32>
    %38 = math.tanh %37 : vector<8x128xf32>
    %cst_18 = arith.constant 1.000000e+00 : f32
    %39 = vector.broadcast %cst_18 : f32 to vector<8x128xf32>
    %40 = arith.subf %39, %35 : vector<8x128xf32>
    %41 = arith.mulf %40, %38 : vector<8x128xf32>
    %42 = arith.mulf %35, %10 : vector<8x128xf32>
    %43 = arith.addf %41, %42 : vector<8x128xf32>
    %44 = vector.broadcast %c0_i32 : i32 to vector<8x1xi32>
    %45 = arith.cmpi eq, %7, %44 : vector<8x1xi32>
    %46 = vector.shape_cast %45 : vector<8x1xi1> to vector<8x1xi1>
    %47 = vector.broadcast %46 : vector<8x1xi1> to vector<8x128xi1>
    %48 = arith.select %47, %43, %10 : vector<8x128xi1>, vector<8x128xf32>
    %c1_i32 = arith.constant 1 : i32
    %c8_i32_19 = arith.constant 8 : i32
    %49 = arith.muli %c1_i32, %c8_i32_19 : i32
    %50 = arith.index_cast %49 : i32 to index
    %c0_20 = arith.constant 0 : index
    %51 = vector.load %arg8[%50, %c0_20] : memref<64x384xf32, #tpu.memory_space<vmem>>, vector<8x384xf32>
    %52 = arith.truncf %43 : vector<8x128xf32> to vector<8x128xbf16>
    %cst_21 = arith.constant dense<0.000000e+00> : vector<8x384xf32>
    %53 = tpu.matmul %52, %8, %cst_21 {dimension_numbers = #tpu.dot_dimension_numbers<[1], [0], [0], [1], [0, 0, 1, 1], [], []>} : vector<8x128xbf16>, vector<128x384xbf16>, vector<8x384xf32> -> vector<8x384xf32>
    %54 = vector.broadcast %9 : vector<1x384xf32> to vector<8x384xf32>
    %55 = arith.addf %53, %54 : vector<8x384xf32>
    %56 = vector.extract_strided_slice %51 {offsets = [0, 0], sizes = [8, 128], strides = [1, 1]} : vector<8x384xf32> to vector<8x128xf32>
    %57 = vector.extract_strided_slice %51 {offsets = [0, 128], sizes = [8, 128], strides = [1, 1]} : vector<8x384xf32> to vector<8x128xf32>
    %58 = vector.extract_strided_slice %51 {offsets = [0, 256], sizes = [8, 128], strides = [1, 1]} : vector<8x384xf32> to vector<8x128xf32>
    %59 = vector.extract_strided_slice %55 {offsets = [0, 0], sizes = [8, 128], strides = [1, 1]} : vector<8x384xf32> to vector<8x128xf32>
    %60 = vector.extract_strided_slice %55 {offsets = [0, 128], sizes = [8, 128], strides = [1, 1]} : vector<8x384xf32> to vector<8x128xf32>
    %61 = vector.extract_strided_slice %55 {offsets = [0, 256], sizes = [8, 128], strides = [1, 1]} : vector<8x384xf32> to vector<8x128xf32>
    %62 = arith.addf %56, %59 : vector<8x128xf32>
    %63 = arith.negf %62 : vector<8x128xf32>
    %64 = math.exp %63 : vector<8x128xf32>
    %cst_22 = arith.constant 1.000000e+00 : f32
    %65 = vector.broadcast %cst_22 : f32 to vector<8x128xf32>
    %66 = arith.addf %65, %64 : vector<8x128xf32>
    %67 = arith.divf %65, %66 : vector<8x128xf32>
    %68 = arith.addf %57, %60 : vector<8x128xf32>
    %69 = arith.negf %68 : vector<8x128xf32>
    %70 = math.exp %69 : vector<8x128xf32>
    %cst_23 = arith.constant 1.000000e+00 : f32
    %71 = vector.broadcast %cst_23 : f32 to vector<8x128xf32>
    %72 = arith.addf %71, %70 : vector<8x128xf32>
    %73 = arith.divf %71, %72 : vector<8x128xf32>
    %74 = arith.mulf %67, %61 : vector<8x128xf32>
    %75 = arith.addf %58, %74 : vector<8x128xf32>
    %76 = math.tanh %75 : vector<8x128xf32>
    %cst_24 = arith.constant 1.000000e+00 : f32
    %77 = vector.broadcast %cst_24 : f32 to vector<8x128xf32>
    %78 = arith.subf %77, %73 : vector<8x128xf32>
    %79 = arith.mulf %78, %76 : vector<8x128xf32>
    %80 = arith.mulf %73, %43 : vector<8x128xf32>
    %81 = arith.addf %79, %80 : vector<8x128xf32>
    %82 = vector.broadcast %c1_i32 : i32 to vector<8x1xi32>
    %83 = arith.cmpi eq, %7, %82 : vector<8x1xi32>
    %84 = vector.shape_cast %83 : vector<8x1xi1> to vector<8x1xi1>
    %85 = vector.broadcast %84 : vector<8x1xi1> to vector<8x128xi1>
    %86 = arith.select %85, %81, %48 : vector<8x128xi1>, vector<8x128xf32>
    %c2_i32 = arith.constant 2 : i32
    %c8_i32_25 = arith.constant 8 : i32
    %87 = arith.muli %c2_i32, %c8_i32_25 : i32
    %88 = arith.index_cast %87 : i32 to index
    %c0_26 = arith.constant 0 : index
    %89 = vector.load %arg8[%88, %c0_26] : memref<64x384xf32, #tpu.memory_space<vmem>>, vector<8x384xf32>
    %90 = arith.truncf %81 : vector<8x128xf32> to vector<8x128xbf16>
    %cst_27 = arith.constant dense<0.000000e+00> : vector<8x384xf32>
    %91 = tpu.matmul %90, %8, %cst_27 {dimension_numbers = #tpu.dot_dimension_numbers<[1], [0], [0], [1], [0, 0, 1, 1], [], []>} : vector<8x128xbf16>, vector<128x384xbf16>, vector<8x384xf32> -> vector<8x384xf32>
    %92 = vector.broadcast %9 : vector<1x384xf32> to vector<8x384xf32>
    %93 = arith.addf %91, %92 : vector<8x384xf32>
    %94 = vector.extract_strided_slice %89 {offsets = [0, 0], sizes = [8, 128], strides = [1, 1]} : vector<8x384xf32> to vector<8x128xf32>
    %95 = vector.extract_strided_slice %89 {offsets = [0, 128], sizes = [8, 128], strides = [1, 1]} : vector<8x384xf32> to vector<8x128xf32>
    %96 = vector.extract_strided_slice %89 {offsets = [0, 256], sizes = [8, 128], strides = [1, 1]} : vector<8x384xf32> to vector<8x128xf32>
    %97 = vector.extract_strided_slice %93 {offsets = [0, 0], sizes = [8, 128], strides = [1, 1]} : vector<8x384xf32> to vector<8x128xf32>
    %98 = vector.extract_strided_slice %93 {offsets = [0, 128], sizes = [8, 128], strides = [1, 1]} : vector<8x384xf32> to vector<8x128xf32>
    %99 = vector.extract_strided_slice %93 {offsets = [0, 256], sizes = [8, 128], strides = [1, 1]} : vector<8x384xf32> to vector<8x128xf32>
    %100 = arith.addf %94, %97 : vector<8x128xf32>
    %101 = arith.negf %100 : vector<8x128xf32>
    %102 = math.exp %101 : vector<8x128xf32>
    %cst_28 = arith.constant 1.000000e+00 : f32
    %103 = vector.broadcast %cst_28 : f32 to vector<8x128xf32>
    %104 = arith.addf %103, %102 : vector<8x128xf32>
    %105 = arith.divf %103, %104 : vector<8x128xf32>
    %106 = arith.addf %95, %98 : vector<8x128xf32>
    %107 = arith.negf %106 : vector<8x128xf32>
    %108 = math.exp %107 : vector<8x128xf32>
    %cst_29 = arith.constant 1.000000e+00 : f32
    %109 = vector.broadcast %cst_29 : f32 to vector<8x128xf32>
    %110 = arith.addf %109, %108 : vector<8x128xf32>
    %111 = arith.divf %109, %110 : vector<8x128xf32>
    %112 = arith.mulf %105, %99 : vector<8x128xf32>
    %113 = arith.addf %96, %112 : vector<8x128xf32>
    %114 = math.tanh %113 : vector<8x128xf32>
    %cst_30 = arith.constant 1.000000e+00 : f32
    %115 = vector.broadcast %cst_30 : f32 to vector<8x128xf32>
    %116 = arith.subf %115, %111 : vector<8x128xf32>
    %117 = arith.mulf %116, %114 : vector<8x128xf32>
    %118 = arith.mulf %111, %81 : vector<8x128xf32>
    %119 = arith.addf %117, %118 : vector<8x128xf32>
    %120 = vector.broadcast %c2_i32 : i32 to vector<8x1xi32>
    %121 = arith.cmpi eq, %7, %120 : vector<8x1xi32>
    %122 = vector.shape_cast %121 : vector<8x1xi1> to vector<8x1xi1>
    %123 = vector.broadcast %122 : vector<8x1xi1> to vector<8x128xi1>
    %124 = arith.select %123, %119, %86 : vector<8x128xi1>, vector<8x128xf32>
    %c3_i32 = arith.constant 3 : i32
    %c8_i32_31 = arith.constant 8 : i32
    %125 = arith.muli %c3_i32, %c8_i32_31 : i32
    %126 = arith.index_cast %125 : i32 to index
    %c0_32 = arith.constant 0 : index
    %127 = vector.load %arg8[%126, %c0_32] : memref<64x384xf32, #tpu.memory_space<vmem>>, vector<8x384xf32>
    %128 = arith.truncf %119 : vector<8x128xf32> to vector<8x128xbf16>
    %cst_33 = arith.constant dense<0.000000e+00> : vector<8x384xf32>
    %129 = tpu.matmul %128, %8, %cst_33 {dimension_numbers = #tpu.dot_dimension_numbers<[1], [0], [0], [1], [0, 0, 1, 1], [], []>} : vector<8x128xbf16>, vector<128x384xbf16>, vector<8x384xf32> -> vector<8x384xf32>
    %130 = vector.broadcast %9 : vector<1x384xf32> to vector<8x384xf32>
    %131 = arith.addf %129, %130 : vector<8x384xf32>
    %132 = vector.extract_strided_slice %127 {offsets = [0, 0], sizes = [8, 128], strides = [1, 1]} : vector<8x384xf32> to vector<8x128xf32>
    %133 = vector.extract_strided_slice %127 {offsets = [0, 128], sizes = [8, 128], strides = [1, 1]} : vector<8x384xf32> to vector<8x128xf32>
    %134 = vector.extract_strided_slice %127 {offsets = [0, 256], sizes = [8, 128], strides = [1, 1]} : vector<8x384xf32> to vector<8x128xf32>
    %135 = vector.extract_strided_slice %131 {offsets = [0, 0], sizes = [8, 128], strides = [1, 1]} : vector<8x384xf32> to vector<8x128xf32>
    %136 = vector.extract_strided_slice %131 {offsets = [0, 128], sizes = [8, 128], strides = [1, 1]} : vector<8x384xf32> to vector<8x128xf32>
    %137 = vector.extract_strided_slice %131 {offsets = [0, 256], sizes = [8, 128], strides = [1, 1]} : vector<8x384xf32> to vector<8x128xf32>
    %138 = arith.addf %132, %135 : vector<8x128xf32>
    %139 = arith.negf %138 : vector<8x128xf32>
    %140 = math.exp %139 : vector<8x128xf32>
    %cst_34 = arith.constant 1.000000e+00 : f32
    %141 = vector.broadcast %cst_34 : f32 to vector<8x128xf32>
    %142 = arith.addf %141, %140 : vector<8x128xf32>
    %143 = arith.divf %141, %142 : vector<8x128xf32>
    %144 = arith.addf %133, %136 : vector<8x128xf32>
    %145 = arith.negf %144 : vector<8x128xf32>
    %146 = math.exp %145 : vector<8x128xf32>
    %cst_35 = arith.constant 1.000000e+00 : f32
    %147 = vector.broadcast %cst_35 : f32 to vector<8x128xf32>
    %148 = arith.addf %147, %146 : vector<8x128xf32>
    %149 = arith.divf %147, %148 : vector<8x128xf32>
    %150 = arith.mulf %143, %137 : vector<8x128xf32>
    %151 = arith.addf %134, %150 : vector<8x128xf32>
    %152 = math.tanh %151 : vector<8x128xf32>
    %cst_36 = arith.constant 1.000000e+00 : f32
    %153 = vector.broadcast %cst_36 : f32 to vector<8x128xf32>
    %154 = arith.subf %153, %149 : vector<8x128xf32>
    %155 = arith.mulf %154, %152 : vector<8x128xf32>
    %156 = arith.mulf %149, %119 : vector<8x128xf32>
    %157 = arith.addf %155, %156 : vector<8x128xf32>
    %158 = vector.broadcast %c3_i32 : i32 to vector<8x1xi32>
    %159 = arith.cmpi eq, %7, %158 : vector<8x1xi32>
    %160 = vector.shape_cast %159 : vector<8x1xi1> to vector<8x1xi1>
    %161 = vector.broadcast %160 : vector<8x1xi1> to vector<8x128xi1>
    %162 = arith.select %161, %157, %124 : vector<8x128xi1>, vector<8x128xf32>
    %c4_i32 = arith.constant 4 : i32
    %c8_i32_37 = arith.constant 8 : i32
    %163 = arith.muli %c4_i32, %c8_i32_37 : i32
    %164 = arith.index_cast %163 : i32 to index
    %c0_38 = arith.constant 0 : index
    %165 = vector.load %arg8[%164, %c0_38] : memref<64x384xf32, #tpu.memory_space<vmem>>, vector<8x384xf32>
    %166 = arith.truncf %157 : vector<8x128xf32> to vector<8x128xbf16>
    %cst_39 = arith.constant dense<0.000000e+00> : vector<8x384xf32>
    %167 = tpu.matmul %166, %8, %cst_39 {dimension_numbers = #tpu.dot_dimension_numbers<[1], [0], [0], [1], [0, 0, 1, 1], [], []>} : vector<8x128xbf16>, vector<128x384xbf16>, vector<8x384xf32> -> vector<8x384xf32>
    %168 = vector.broadcast %9 : vector<1x384xf32> to vector<8x384xf32>
    %169 = arith.addf %167, %168 : vector<8x384xf32>
    %170 = vector.extract_strided_slice %165 {offsets = [0, 0], sizes = [8, 128], strides = [1, 1]} : vector<8x384xf32> to vector<8x128xf32>
    %171 = vector.extract_strided_slice %165 {offsets = [0, 128], sizes = [8, 128], strides = [1, 1]} : vector<8x384xf32> to vector<8x128xf32>
    %172 = vector.extract_strided_slice %165 {offsets = [0, 256], sizes = [8, 128], strides = [1, 1]} : vector<8x384xf32> to vector<8x128xf32>
    %173 = vector.extract_strided_slice %169 {offsets = [0, 0], sizes = [8, 128], strides = [1, 1]} : vector<8x384xf32> to vector<8x128xf32>
    %174 = vector.extract_strided_slice %169 {offsets = [0, 128], sizes = [8, 128], strides = [1, 1]} : vector<8x384xf32> to vector<8x128xf32>
    %175 = vector.extract_strided_slice %169 {offsets = [0, 256], sizes = [8, 128], strides = [1, 1]} : vector<8x384xf32> to vector<8x128xf32>
    %176 = arith.addf %170, %173 : vector<8x128xf32>
    %177 = arith.negf %176 : vector<8x128xf32>
    %178 = math.exp %177 : vector<8x128xf32>
    %cst_40 = arith.constant 1.000000e+00 : f32
    %179 = vector.broadcast %cst_40 : f32 to vector<8x128xf32>
    %180 = arith.addf %179, %178 : vector<8x128xf32>
    %181 = arith.divf %179, %180 : vector<8x128xf32>
    %182 = arith.addf %171, %174 : vector<8x128xf32>
    %183 = arith.negf %182 : vector<8x128xf32>
    %184 = math.exp %183 : vector<8x128xf32>
    %cst_41 = arith.constant 1.000000e+00 : f32
    %185 = vector.broadcast %cst_41 : f32 to vector<8x128xf32>
    %186 = arith.addf %185, %184 : vector<8x128xf32>
    %187 = arith.divf %185, %186 : vector<8x128xf32>
    %188 = arith.mulf %181, %175 : vector<8x128xf32>
    %189 = arith.addf %172, %188 : vector<8x128xf32>
    %190 = math.tanh %189 : vector<8x128xf32>
    %cst_42 = arith.constant 1.000000e+00 : f32
    %191 = vector.broadcast %cst_42 : f32 to vector<8x128xf32>
    %192 = arith.subf %191, %187 : vector<8x128xf32>
    %193 = arith.mulf %192, %190 : vector<8x128xf32>
    %194 = arith.mulf %187, %157 : vector<8x128xf32>
    %195 = arith.addf %193, %194 : vector<8x128xf32>
    %196 = vector.broadcast %c4_i32 : i32 to vector<8x1xi32>
    %197 = arith.cmpi eq, %7, %196 : vector<8x1xi32>
    %198 = vector.shape_cast %197 : vector<8x1xi1> to vector<8x1xi1>
    %199 = vector.broadcast %198 : vector<8x1xi1> to vector<8x128xi1>
    %200 = arith.select %199, %195, %162 : vector<8x128xi1>, vector<8x128xf32>
    %c5_i32 = arith.constant 5 : i32
    %c8_i32_43 = arith.constant 8 : i32
    %201 = arith.muli %c5_i32, %c8_i32_43 : i32
    %202 = arith.index_cast %201 : i32 to index
    %c0_44 = arith.constant 0 : index
    %203 = vector.load %arg8[%202, %c0_44] : memref<64x384xf32, #tpu.memory_space<vmem>>, vector<8x384xf32>
    %204 = arith.truncf %195 : vector<8x128xf32> to vector<8x128xbf16>
    %cst_45 = arith.constant dense<0.000000e+00> : vector<8x384xf32>
    %205 = tpu.matmul %204, %8, %cst_45 {dimension_numbers = #tpu.dot_dimension_numbers<[1], [0], [0], [1], [0, 0, 1, 1], [], []>} : vector<8x128xbf16>, vector<128x384xbf16>, vector<8x384xf32> -> vector<8x384xf32>
    %206 = vector.broadcast %9 : vector<1x384xf32> to vector<8x384xf32>
    %207 = arith.addf %205, %206 : vector<8x384xf32>
    %208 = vector.extract_strided_slice %203 {offsets = [0, 0], sizes = [8, 128], strides = [1, 1]} : vector<8x384xf32> to vector<8x128xf32>
    %209 = vector.extract_strided_slice %203 {offsets = [0, 128], sizes = [8, 128], strides = [1, 1]} : vector<8x384xf32> to vector<8x128xf32>
    %210 = vector.extract_strided_slice %203 {offsets = [0, 256], sizes = [8, 128], strides = [1, 1]} : vector<8x384xf32> to vector<8x128xf32>
    %211 = vector.extract_strided_slice %207 {offsets = [0, 0], sizes = [8, 128], strides = [1, 1]} : vector<8x384xf32> to vector<8x128xf32>
    %212 = vector.extract_strided_slice %207 {offsets = [0, 128], sizes = [8, 128], strides = [1, 1]} : vector<8x384xf32> to vector<8x128xf32>
    %213 = vector.extract_strided_slice %207 {offsets = [0, 256], sizes = [8, 128], strides = [1, 1]} : vector<8x384xf32> to vector<8x128xf32>
    %214 = arith.addf %208, %211 : vector<8x128xf32>
    %215 = arith.negf %214 : vector<8x128xf32>
    %216 = math.exp %215 : vector<8x128xf32>
    %cst_46 = arith.constant 1.000000e+00 : f32
    %217 = vector.broadcast %cst_46 : f32 to vector<8x128xf32>
    %218 = arith.addf %217, %216 : vector<8x128xf32>
    %219 = arith.divf %217, %218 : vector<8x128xf32>
    %220 = arith.addf %209, %212 : vector<8x128xf32>
    %221 = arith.negf %220 : vector<8x128xf32>
    %222 = math.exp %221 : vector<8x128xf32>
    %cst_47 = arith.constant 1.000000e+00 : f32
    %223 = vector.broadcast %cst_47 : f32 to vector<8x128xf32>
    %224 = arith.addf %223, %222 : vector<8x128xf32>
    %225 = arith.divf %223, %224 : vector<8x128xf32>
    %226 = arith.mulf %219, %213 : vector<8x128xf32>
    %227 = arith.addf %210, %226 : vector<8x128xf32>
    %228 = math.tanh %227 : vector<8x128xf32>
    %cst_48 = arith.constant 1.000000e+00 : f32
    %229 = vector.broadcast %cst_48 : f32 to vector<8x128xf32>
    %230 = arith.subf %229, %225 : vector<8x128xf32>
    %231 = arith.mulf %230, %228 : vector<8x128xf32>
    %232 = arith.mulf %225, %195 : vector<8x128xf32>
    %233 = arith.addf %231, %232 : vector<8x128xf32>
    %234 = vector.broadcast %c5_i32 : i32 to vector<8x1xi32>
    %235 = arith.cmpi eq, %7, %234 : vector<8x1xi32>
    %236 = vector.shape_cast %235 : vector<8x1xi1> to vector<8x1xi1>
    %237 = vector.broadcast %236 : vector<8x1xi1> to vector<8x128xi1>
    %238 = arith.select %237, %233, %200 : vector<8x128xi1>, vector<8x128xf32>
    %c6_i32 = arith.constant 6 : i32
    %c8_i32_49 = arith.constant 8 : i32
    %239 = arith.muli %c6_i32, %c8_i32_49 : i32
    %240 = arith.index_cast %239 : i32 to index
    %c0_50 = arith.constant 0 : index
    %241 = vector.load %arg8[%240, %c0_50] : memref<64x384xf32, #tpu.memory_space<vmem>>, vector<8x384xf32>
    %242 = arith.truncf %233 : vector<8x128xf32> to vector<8x128xbf16>
    %cst_51 = arith.constant dense<0.000000e+00> : vector<8x384xf32>
    %243 = tpu.matmul %242, %8, %cst_51 {dimension_numbers = #tpu.dot_dimension_numbers<[1], [0], [0], [1], [0, 0, 1, 1], [], []>} : vector<8x128xbf16>, vector<128x384xbf16>, vector<8x384xf32> -> vector<8x384xf32>
    %244 = vector.broadcast %9 : vector<1x384xf32> to vector<8x384xf32>
    %245 = arith.addf %243, %244 : vector<8x384xf32>
    %246 = vector.extract_strided_slice %241 {offsets = [0, 0], sizes = [8, 128], strides = [1, 1]} : vector<8x384xf32> to vector<8x128xf32>
    %247 = vector.extract_strided_slice %241 {offsets = [0, 128], sizes = [8, 128], strides = [1, 1]} : vector<8x384xf32> to vector<8x128xf32>
    %248 = vector.extract_strided_slice %241 {offsets = [0, 256], sizes = [8, 128], strides = [1, 1]} : vector<8x384xf32> to vector<8x128xf32>
    %249 = vector.extract_strided_slice %245 {offsets = [0, 0], sizes = [8, 128], strides = [1, 1]} : vector<8x384xf32> to vector<8x128xf32>
    %250 = vector.extract_strided_slice %245 {offsets = [0, 128], sizes = [8, 128], strides = [1, 1]} : vector<8x384xf32> to vector<8x128xf32>
    %251 = vector.extract_strided_slice %245 {offsets = [0, 256], sizes = [8, 128], strides = [1, 1]} : vector<8x384xf32> to vector<8x128xf32>
    %252 = arith.addf %246, %249 : vector<8x128xf32>
    %253 = arith.negf %252 : vector<8x128xf32>
    %254 = math.exp %253 : vector<8x128xf32>
    %cst_52 = arith.constant 1.000000e+00 : f32
    %255 = vector.broadcast %cst_52 : f32 to vector<8x128xf32>
    %256 = arith.addf %255, %254 : vector<8x128xf32>
    %257 = arith.divf %255, %256 : vector<8x128xf32>
    %258 = arith.addf %247, %250 : vector<8x128xf32>
    %259 = arith.negf %258 : vector<8x128xf32>
    %260 = math.exp %259 : vector<8x128xf32>
    %cst_53 = arith.constant 1.000000e+00 : f32
    %261 = vector.broadcast %cst_53 : f32 to vector<8x128xf32>
    %262 = arith.addf %261, %260 : vector<8x128xf32>
    %263 = arith.divf %261, %262 : vector<8x128xf32>
    %264 = arith.mulf %257, %251 : vector<8x128xf32>
    %265 = arith.addf %248, %264 : vector<8x128xf32>
    %266 = math.tanh %265 : vector<8x128xf32>
    %cst_54 = arith.constant 1.000000e+00 : f32
    %267 = vector.broadcast %cst_54 : f32 to vector<8x128xf32>
    %268 = arith.subf %267, %263 : vector<8x128xf32>
    %269 = arith.mulf %268, %266 : vector<8x128xf32>
    %270 = arith.mulf %263, %233 : vector<8x128xf32>
    %271 = arith.addf %269, %270 : vector<8x128xf32>
    %272 = vector.broadcast %c6_i32 : i32 to vector<8x1xi32>
    %273 = arith.cmpi eq, %7, %272 : vector<8x1xi32>
    %274 = vector.shape_cast %273 : vector<8x1xi1> to vector<8x1xi1>
    %275 = vector.broadcast %274 : vector<8x1xi1> to vector<8x128xi1>
    %276 = arith.select %275, %271, %238 : vector<8x128xi1>, vector<8x128xf32>
    %c7_i32 = arith.constant 7 : i32
    %c8_i32_55 = arith.constant 8 : i32
    %277 = arith.muli %c7_i32, %c8_i32_55 : i32
    %278 = arith.index_cast %277 : i32 to index
    %c0_56 = arith.constant 0 : index
    %279 = vector.load %arg8[%278, %c0_56] : memref<64x384xf32, #tpu.memory_space<vmem>>, vector<8x384xf32>
    %280 = arith.truncf %271 : vector<8x128xf32> to vector<8x128xbf16>
    %cst_57 = arith.constant dense<0.000000e+00> : vector<8x384xf32>
    %281 = tpu.matmul %280, %8, %cst_57 {dimension_numbers = #tpu.dot_dimension_numbers<[1], [0], [0], [1], [0, 0, 1, 1], [], []>} : vector<8x128xbf16>, vector<128x384xbf16>, vector<8x384xf32> -> vector<8x384xf32>
    %282 = vector.broadcast %9 : vector<1x384xf32> to vector<8x384xf32>
    %283 = arith.addf %281, %282 : vector<8x384xf32>
    %284 = vector.extract_strided_slice %279 {offsets = [0, 0], sizes = [8, 128], strides = [1, 1]} : vector<8x384xf32> to vector<8x128xf32>
    %285 = vector.extract_strided_slice %279 {offsets = [0, 128], sizes = [8, 128], strides = [1, 1]} : vector<8x384xf32> to vector<8x128xf32>
    %286 = vector.extract_strided_slice %279 {offsets = [0, 256], sizes = [8, 128], strides = [1, 1]} : vector<8x384xf32> to vector<8x128xf32>
    %287 = vector.extract_strided_slice %283 {offsets = [0, 0], sizes = [8, 128], strides = [1, 1]} : vector<8x384xf32> to vector<8x128xf32>
    %288 = vector.extract_strided_slice %283 {offsets = [0, 128], sizes = [8, 128], strides = [1, 1]} : vector<8x384xf32> to vector<8x128xf32>
    %289 = vector.extract_strided_slice %283 {offsets = [0, 256], sizes = [8, 128], strides = [1, 1]} : vector<8x384xf32> to vector<8x128xf32>
    %290 = arith.addf %284, %287 : vector<8x128xf32>
    %291 = arith.negf %290 : vector<8x128xf32>
    %292 = math.exp %291 : vector<8x128xf32>
    %cst_58 = arith.constant 1.000000e+00 : f32
    %293 = vector.broadcast %cst_58 : f32 to vector<8x128xf32>
    %294 = arith.addf %293, %292 : vector<8x128xf32>
    %295 = arith.divf %293, %294 : vector<8x128xf32>
    %296 = arith.addf %285, %288 : vector<8x128xf32>
    %297 = arith.negf %296 : vector<8x128xf32>
    %298 = math.exp %297 : vector<8x128xf32>
    %cst_59 = arith.constant 1.000000e+00 : f32
    %299 = vector.broadcast %cst_59 : f32 to vector<8x128xf32>
    %300 = arith.addf %299, %298 : vector<8x128xf32>
    %301 = arith.divf %299, %300 : vector<8x128xf32>
    %302 = arith.mulf %295, %289 : vector<8x128xf32>
    %303 = arith.addf %286, %302 : vector<8x128xf32>
    %304 = math.tanh %303 : vector<8x128xf32>
    %cst_60 = arith.constant 1.000000e+00 : f32
    %305 = vector.broadcast %cst_60 : f32 to vector<8x128xf32>
    %306 = arith.subf %305, %301 : vector<8x128xf32>
    %307 = arith.mulf %306, %304 : vector<8x128xf32>
    %308 = arith.mulf %301, %271 : vector<8x128xf32>
    %309 = arith.addf %307, %308 : vector<8x128xf32>
    %310 = vector.broadcast %c7_i32 : i32 to vector<8x1xi32>
    %311 = arith.cmpi eq, %7, %310 : vector<8x1xi32>
    %312 = vector.shape_cast %311 : vector<8x1xi1> to vector<8x1xi1>
    %313 = vector.broadcast %312 : vector<8x1xi1> to vector<8x128xi1>
    %314 = arith.select %313, %309, %276 : vector<8x128xi1>, vector<8x128xf32>
    %c8_i32_61 = arith.constant 8 : i32
    %c0_62 = arith.constant 0 : index
    %c0_63 = arith.constant 0 : index
    %315 = vector.load %arg7[%c0_62, %c0_63] : memref<8x128xf32, #tpu.memory_space<vmem>>, vector<8x128xf32>
    tpu.vector_store %arg7[%c0_62, %c0_63], %314 {strides = array<i32>} : memref<8x128xf32, #tpu.memory_space<vmem>>, vector<8x128xf32>,
    return
  }
  func.func @transform_0(%arg0: i32) -> (i32, i32) {
    %c0_i32 = arith.constant 0 : i32
    %c0_i32_0 = arith.constant 0 : i32
    %c0_i32_1 = arith.constant 0 : i32
    return %c0_i32, %c0_i32_0 : i32, i32
  }
  func.func @transform_1(%arg0: i32) -> (i32, i32) {
    %c0_i32 = arith.constant 0 : i32
    %c0_i32_0 = arith.constant 0 : i32
    %c0_i32_1 = arith.constant 0 : i32
    return %c0_i32, %c0_i32_0 : i32, i32
  }
  func.func @transform_2(%arg0: i32) -> (i32, i32) {
    %c0_i32 = arith.constant 0 : i32
    %c0_i32_0 = arith.constant 0 : i32
    %c0_i32_1 = arith.constant 0 : i32
    return %c0_i32, %c0_i32_0 : i32, i32
  }
  func.func @transform_3(%arg0: i32) -> (i32, i32) {
    %c0_i32 = arith.constant 0 : i32
    %c0_i32_0 = arith.constant 0 : i32
    %c0_i32_1 = arith.constant 0 : i32
    return %c0_i32, %c0_i32_0 : i32, i32
  }
  func.func @transform_4(%arg0: i32) -> (i32, i32) {
    %c0_i32 = arith.constant 0 : i32
    %c0_i32_0 = arith.constant 0 : i32
    %c0_i32_1 = arith.constant 0 : i32
    return %c0_i32, %c0_i32_0 : i32, i32
  }
  func.func @transform_5(%arg0: i32) -> (i32, i32) {
    %c0_i32 = arith.constant 0 : i32
    %c0_i32_0 = arith.constant 0 : i32
    %c0_i32_1 = arith.constant 0 : i32
    return %c0_i32, %c0_i32_0 : i32, i32
  }
  func.func @transform_6(%arg0: i32) -> (i32, i32) {
    %c0_i32 = arith.constant 0 : i32
    %c0_i32_0 = arith.constant 0 : i32
    %c0_i32_1 = arith.constant 0 : i32
    return %c0_i32, %c0_i32_0 : i32, i32
  }
}

</mosaic_0001>

<llo_original>
// kernel: encoder_rnn_forward.1
$region0: #{encoder_rnn_forward.1}
  #allocation0 [shape = 'u32[]', space=smem, size = 0x4, offset = 0x4, fixed_abs, tag = 'smem constant byte address 0x4 - core index']
  #allocation1 [shape = 'u32[144,128]{1,0:T(1,128)}', space=vmem, size = 0x12000, scoped, tag = 'internal scratch']
  #allocation2 [shape = 'f32[64,384]{1,0:T(8,128)}', space=vmem, size = 0x18000, scoped, tag = 'scratch operand']
  %s0 = inlined_call_operand.vmem [shape: bf16[64,32], index: 0, kind: input, shape index: {}]
  %s1 = inlined_call_operand.vmem [shape: s32[8,1], index: 1, kind: input, shape index: {}]
  %s2 = inlined_call_operand.vmem [shape: bf16[32,384], index: 2, kind: input, shape index: {}]
  %s3 = inlined_call_operand.vmem [shape: f32[1,384], index: 3, kind: input, shape index: {}]
  %s4 = inlined_call_operand.vmem [shape: bf16[128,384], index: 4, kind: input, shape index: {}]
  %s5 = inlined_call_operand.vmem [shape: f32[1,384], index: 5, kind: input, shape index: {}]
  %s6 = inlined_call_operand.vmem [shape: f32[8,128], index: 6, kind: output, shape index: {}]
  %s7 = sld [smem:[#allocation0]]
  $region34: #{encoder_rnn_forward.1} parent=0
    _
  %s9 = ssub.s32 1, %s7
  %s10 = scalar_select 0, %s9, %s7
  // Predicated region
  $region2: #{encoder_rnn_forward.1} parent=0 // pred_check
    _
  $region3: #{encoder_rnn_forward.1} parent=0 // pred_check_branch
    %12 = sbr.rel (0) target = $region5
  $region4: #{encoder_rnn_forward.1} parent=0 // pred_region
    _
  $region5: #{encoder_rnn_forward.1} parent=0 // pred_fallthru
    _
  // Predicated region
  $region6: #{encoder_rnn_forward.1} parent=0 // pred_check
    _
  $region7: #{encoder_rnn_forward.1} parent=0 // pred_check_branch
    %14 = sbr.rel (0) target = $region9
  $region8: #{encoder_rnn_forward.1} parent=0 // pred_region
    _
  $region9: #{encoder_rnn_forward.1} parent=0 // pred_fallthru
    _
  // Predicated region
  $region10: #{encoder_rnn_forward.1} parent=0 // pred_check
    _
  $region11: #{encoder_rnn_forward.1} parent=0 // pred_check_branch
    %16 = sbr.rel (0) target = $region13
  $region12: #{encoder_rnn_forward.1} parent=0 // pred_region
    _
  $region13: #{encoder_rnn_forward.1} parent=0 // pred_fallthru
    _
  // Predicated region
  $region14: #{encoder_rnn_forward.1} parent=0 // pred_check
    _
  $region15: #{encoder_rnn_forward.1} parent=0 // pred_check_branch
    %18 = sbr.rel (0) target = $region17
  $region16: #{encoder_rnn_forward.1} parent=0 // pred_region
    _
  $region17: #{encoder_rnn_forward.1} parent=0 // pred_fallthru
    _
  // Predicated region
  $region18: #{encoder_rnn_forward.1} parent=0 // pred_check
    _
  $region19: #{encoder_rnn_forward.1} parent=0 // pred_check_branch
    %20 = sbr.rel (0) target = $region21
  $region20: #{encoder_rnn_forward.1} parent=0 // pred_region
    _
  $region21: #{encoder_rnn_forward.1} parent=0 // pred_fallthru
    _
  // Predicated region
  $region22: #{encoder_rnn_forward.1} parent=0 // pred_check
    _
  $region23: #{encoder_rnn_forward.1} parent=0 // pred_check_branch
    %22 = sbr.rel (0) target = $region25
  $region24: #{encoder_rnn_forward.1} parent=0 // pred_region
    _
  $region25: #{encoder_rnn_forward.1} parent=0 // pred_fallthru
    _
  %v24 = vld [vmem:[%s0] sm:$0xf]
  %v25 = vld [vmem:[%s0 + $0x4] sm:$0xf]
  %v26 = vld [vmem:[%s0 + $0x8] sm:$0xf]
  %v27 = vld [vmem:[%s0 + $0xc] sm:$0xf]
  %v28 = vld [vmem:[%s0 + $0x10] sm:$0xf]
  %v29 = vld [vmem:[%s0 + $0x14] sm:$0xf]
  %v30 = vld [vmem:[%s0 + $0x18] sm:$0xf]
  %v31 = vld [vmem:[%s0 + $0x1c] sm:$0xf]
  %v32 = vld [vmem:[%s2] sm:$0xff]
  %v33 = vld [vmem:[%s2 + $0x8] sm:$0xf]
  %v34 = vld [vmem:[%s2 + $0xc] sm:$0xff]
  %v35 = vld [vmem:[%s2 + $0x14] sm:$0xf]
  %v36 = vld [vmem:[%s2 + $0x18] sm:$0xff]
  %v37 = vld [vmem:[%s2 + $0x20] sm:$0xf]
  %v38 = vld [vmem:[%s2 + $0x24] sm:$0xff]
  %v39 = vld [vmem:[%s2 + $0x2c] sm:$0xf]
  %v40 = vld [vmem:[%s3] sm:$0x7]
  %v42 = vlaneseq
  %v43 = vshrl.u32 %v42, 7
  %v44 = vsub.s32 0, %v43
  %v45 = vrot.slane %v40, %v44
  %v46 = vlaneseq
  %v47 = vshrl.u32 %v46, 7
  %v48 = vsub.s32 1, %v47
  %v49 = vrot.slane %v40, %v48
  %v50 = vlaneseq
  %v51 = vshrl.u32 %v50, 7
  %v52 = vsub.s32 2, %v51
  %v53 = vrot.slane %v40, %v52
  %v65 = vunpack.c.l.b16 %v24
  %v66 = vunpack.c.l.b16 %v25
  %v67 = vunpack.c.l.b16 %v26
  %v68 = vunpack.c.l.b16 %v27
  %v69 = vunpack.c.l.b16 %v28
  %v70 = vunpack.c.l.b16 %v29
  %v71 = vunpack.c.l.b16 %v30
  %v72 = vunpack.c.l.b16 %v31
  %v73 = vpack.c.b16 %v66, %v65
  %v74 = vpack.c.b16 %v68, %v67
  %v75 = vpack.c.b16 %v70, %v69
  %v76 = vpack.c.b16 %v72, %v71
  %v85 = vunpack.c.l.b16 %v32
  %v86 = vunpack.c.h.b16 %v32
  %v87 = vunpack.c.l.b16 %v33
  %v88 = vunpack.c.l.b16 %v34
  %v89 = vunpack.c.h.b16 %v34
  %v90 = vunpack.c.l.b16 %v35
  %v91 = vunpack.c.l.b16 %v36
  %v92 = vunpack.c.h.b16 %v36
  %v93 = vunpack.c.l.b16 %v37
  %v94 = vunpack.c.l.b16 %v38
  %v95 = vunpack.c.h.b16 %v38
  %v96 = vunpack.c.l.b16 %v39
  %v97 = vpack.c.b16 %v88, %v85
  %v98 = vpack.c.b16 %v89, %v86
  %v99 = vpack.c.b16 %v90, %v87
  %v100 = vpack.c.b16 %v94, %v91
  %v101 = vpack.c.b16 %v95, %v92
  %v102 = vpack.c.b16 %v96, %v93
  %vm109 = vcmask 261120
  %v111 = vsel %vm109, %v73, 0
  %v114 = vsel %vm109, %v74, 0
  %v117 = vsel %vm109, %v75, 0
  %v120 = vsel %vm109, %v76, 0
  %122 = vmatprep.subr.bf16.mxu0 %v98
  %123 = vmatpush1.bf16.msra.mxu0 %v97
  %124 = vmatprep.subr.bf16.mxu0 %v101
  %125 = vmatpush1.bf16.msra.mxu0 %v100
  %126 = vmatprep.subr.bf16.mxu0 0
  %127 = vmatpush1.bf16.msra.mxu0 0
  %128 = vmatprep.subr.bf16.mxu0 0
  %129 = vmatpush1.bf16.msra.mxu0 0
  %130 = vmatprep.subr.bf16.mxu0 0
  %131 = vmatpush1.bf16.msra.mxu0 0
  %132 = vmatprep.subr.bf16.mxu0 0
  %133 = vmatpush1.bf16.msra.mxu0 0
  %134 = vmatprep.subr.bf16.mxu0 0
  %135 = vmatpush1.bf16.msra.mxu0 0
  %136 = vmatprep.subr.bf16.mxu0 0
  %137 = vmatpush1.bf16.msra.mxu0 0
  %138 = vmatprep.subr.bf16.mxu0 0
  %139 = vmatpush1.bf16.msra.mxu0 0
  %140 = vmatprep.subr.bf16.mxu0 0
  %141 = vmatpush1.bf16.msra.mxu0 0
  %142 = vmatprep.subr.bf16.mxu0 0
  %143 = vmatpush1.bf16.msra.mxu0 0
  %144 = vmatprep.subr.bf16.mxu0 0
  %145 = vmatpush1.bf16.msra.mxu0 0
  %146 = vmatprep.subr.bf16.mxu0 0
  %147 = vmatpush1.bf16.msra.mxu0 0
  %148 = vmatprep.subr.bf16.mxu0 0
  %149 = vmatpush1.bf16.msra.mxu0 0
  %150 = vmatprep.subr.bf16.mxu0 0
  %151 = vmatpush1.bf16.msra.mxu0 0
  %152 = vmatprep.subr.bf16.mxu0 0
  %153 = vmatpush1.bf16.msra.mxu0 0
  %154 = vmatprep.mubr.bf16.mxu0 0
  %155 = vmatmul.mubr.bf16.gmra.mrb[0].mxu0 %v111
  %v156 = vpop.f32.mrb[0].mxu0
  %v157 = vadd.f32 %v45, %v156
  %v158 = vpop.f32.mrb[0].mxu0
  %v159 = vadd.f32 %v49, %v158
  %v160 = vpop.f32.mrb[0].mxu0
  %v161 = vadd.f32 %v45, %v160
  %v162 = vpop.f32.mrb[0].mxu0
  %v163 = vadd.f32 %v49, %v162
  %164 = vmatprep.mubr.bf16.mxu0 0
  %165 = vmatmul.mubr.bf16.gmra.mrb[0].mxu0 %v114
  %v166 = vpop.f32.mrb[0].mxu0
  %v167 = vadd.f32 %v45, %v166
  %v168 = vpop.f32.mrb[0].mxu0
  %v169 = vadd.f32 %v49, %v168
  %v170 = vpop.f32.mrb[0].mxu0
  %v171 = vadd.f32 %v45, %v170
  %v172 = vpop.f32.mrb[0].mxu0
  %v173 = vadd.f32 %v49, %v172
  %174 = vmatprep.mubr.bf16.mxu0 0
  %175 = vmatmul.mubr.bf16.gmra.mrb[0].mxu0 %v117
  %v176 = vpop.f32.mrb[0].mxu0
  %v177 = vadd.f32 %v45, %v176
  %v178 = vpop.f32.mrb[0].mxu0
  %v179 = vadd.f32 %v49, %v178
  %v180 = vpop.f32.mrb[0].mxu0
  %v181 = vadd.f32 %v45, %v180
  %v182 = vpop.f32.mrb[0].mxu0
  %v183 = vadd.f32 %v49, %v182
  %184 = vmatprep.mubr.bf16.mxu0 0
  %185 = vmatmul.mubr.bf16.gmra.mrb[0].mxu0 %v120
  %v186 = vpop.f32.mrb[0].mxu0
  %v187 = vadd.f32 %v45, %v186
  %v188 = vpop.f32.mrb[0].mxu0
  %v189 = vadd.f32 %v49, %v188
  %v190 = vpop.f32.mrb[0].mxu0
  %v191 = vadd.f32 %v45, %v190
  %v192 = vpop.f32.mrb[0].mxu0
  %v193 = vadd.f32 %v49, %v192
  %194 = vdwg.mxu0
  %195 = vmatprep.subr.bf16.mxu0 0
  %196 = vmatpush1.bf16.msra.mxu0 %v99
  %197 = vmatprep.subr.bf16.mxu0 0
  %198 = vmatpush1.bf16.msra.mxu0 %v102
  %199 = vmatprep.subr.bf16.mxu0 0
  %200 = vmatpush1.bf16.msra.mxu0 0
  %201 = vmatprep.subr.bf16.mxu0 0
  %202 = vmatpush1.bf16.msra.mxu0 0
  %203 = vmatprep.subr.bf16.mxu0 0
  %204 = vmatpush1.bf16.msra.mxu0 0
  %205 = vmatprep.subr.bf16.mxu0 0
  %206 = vmatpush1.bf16.msra.mxu0 0
  %207 = vmatprep.subr.bf16.mxu0 0
  %208 = vmatpush1.bf16.msra.mxu0 0
  %209 = vmatprep.subr.bf16.mxu0 0
  %210 = vmatpush1.bf16.msra.mxu0 0
  %211 = vmatprep.subr.bf16.mxu0 0
  %212 = vmatpush1.bf16.msra.mxu0 0
  %213 = vmatprep.subr.bf16.mxu0 0
  %214 = vmatpush1.bf16.msra.mxu0 0
  %215 = vmatprep.subr.bf16.mxu0 0
  %216 = vmatpush1.bf16.msra.mxu0 0
  %217 = vmatprep.subr.bf16.mxu0 0
  %218 = vmatpush1.bf16.msra.mxu0 0
  %219 = vmatprep.subr.bf16.mxu0 0
  %220 = vmatpush1.bf16.msra.mxu0 0
  %221 = vmatprep.subr.bf16.mxu0 0
  %222 = vmatpush1.bf16.msra.mxu0 0
  %223 = vmatprep.subr.bf16.mxu0 0
  %224 = vmatpush1.bf16.msra.mxu0 0
  %225 = vmatprep.subr.bf16.mxu0 0
  %226 = vmatpush1.bf16.msra.mxu0 0
  %227 = vmatprep.mubr.bf16.mxu0 0
  %228 = vmatmul.mubr.bf16.gmra.mrb[0].mxu0 %v111
  %v229 = vpop.f32.mrb[0].mxu0
  %v230 = vadd.f32 %v53, %v229
  %v231 = vpop.f32.mrb[0].mxu0
  %v232 = vpop.f32.mrb[0].mxu0
  %v233 = vadd.f32 %v53, %v232
  %v234 = vpop.f32.mrb[0].mxu0
  %235 = vmatprep.mubr.bf16.mxu0 0
  %236 = vmatmul.mubr.bf16.gmra.mrb[0].mxu0 %v114
  %v237 = vpop.f32.mrb[0].mxu0
  %v238 = vadd.f32 %v53, %v237
  %v239 = vpop.f32.mrb[0].mxu0
  %v240 = vpop.f32.mrb[0].mxu0
  %v241 = vadd.f32 %v53, %v240
  %v242 = vpop.f32.mrb[0].mxu0
  %243 = vmatprep.mubr.bf16.mxu0 0
  %244 = vmatmul.mubr.bf16.gmra.mrb[0].mxu0 %v117
  %v245 = vpop.f32.mrb[0].mxu0
  %v246 = vadd.f32 %v53, %v245
  %v247 = vpop.f32.mrb[0].mxu0
  %v248 = vpop.f32.mrb[0].mxu0
  %v249 = vadd.f32 %v53, %v248
  %v250 = vpop.f32.mrb[0].mxu0
  %251 = vmatprep.mubr.bf16.mxu0 0
  %252 = vmatmul.mubr.bf16.gmra.mrb[0].mxu0 %v120
  %v253 = vpop.f32.mrb[0].mxu0
  %v254 = vadd.f32 %v53, %v253
  %v255 = vpop.f32.mrb[0].mxu0
  %v256 = vpop.f32.mrb[0].mxu0
  %v257 = vadd.f32 %v53, %v256
  %v258 = vpop.f32.mrb[0].mxu0
  %259 = vdwg.mxu0
  %260 = vst [vmem:[#allocation2] sm:$0xff] %v157
  %261 = vst [vmem:[#allocation2 + $0x8] sm:$0xff] %v159
  %262 = vst [vmem:[#allocation2 + $0x10] sm:$0xff] %v230
  %263 = vst [vmem:[#allocation2 + $0x18] sm:$0xff] %v161
  %264 = vst [vmem:[#allocation2 + $0x20] sm:$0xff] %v163
  %265 = vst [vmem:[#allocation2 + $0x28] sm:$0xff] %v233
  %266 = vst [vmem:[#allocation2 + $0x30] sm:$0xff] %v167
  %267 = vst [vmem:[#allocation2 + $0x38] sm:$0xff] %v169
  %268 = vst [vmem:[#allocation2 + $0x40] sm:$0xff] %v238
  %269 = vst [vmem:[#allocation2 + $0x48] sm:$0xff] %v171
  %270 = vst [vmem:[#allocation2 + $0x50] sm:$0xff] %v173
  %271 = vst [vmem:[#allocation2 + $0x58] sm:$0xff] %v241
  %272 = vst [vmem:[#allocation2 + $0x60] sm:$0xff] %v177
  %273 = vst [vmem:[#allocation2 + $0x68] sm:$0xff] %v179
  %274 = vst [vmem:[#allocation2 + $0x70] sm:$0xff] %v246
  %275 = vst [vmem:[#allocation2 + $0x78] sm:$0xff] %v181
  %276 = vst [vmem:[#allocation2 + $0x80] sm:$0xff] %v183
  %277 = vst [vmem:[#allocation2 + $0x88] sm:$0xff] %v249
  %278 = vst [vmem:[#allocation2 + $0x90] sm:$0xff] %v187
  %279 = vst [vmem:[#allocation2 + $0x98] sm:$0xff] %v189
  %280 = vst [vmem:[#allocation2 + $0xa0] sm:$0xff] %v254
  %281 = vst [vmem:[#allocation2 + $0xa8] sm:$0xff] %v191
  %282 = vst [vmem:[#allocation2 + $0xb0] sm:$0xff] %v193
  %283 = vst [vmem:[#allocation2 + $0xb8] sm:$0xff] %v257
  %v284 = vld [vmem:[%s1] sm:$0xff]
  %v285 = vld [vmem:[%s4] sm:$0xff]
  %v286 = vld [vmem:[%s4 + $0x8] sm:$0xf]
  %v287 = vld [vmem:[%s4 + $0xc] sm:$0xff]
  %v288 = vld [vmem:[%s4 + $0x14] sm:$0xf]
  %v289 = vld [vmem:[%s4 + $0x18] sm:$0xff]
  %v290 = vld [vmem:[%s4 + $0x20] sm:$0xf]
  %v291 = vld [vmem:[%s4 + $0x24] sm:$0xff]
  %v292 = vld [vmem:[%s4 + $0x2c] sm:$0xf]
  %v293 = vld [vmem:[%s4 + $0x30] sm:$0xff]
  %v294 = vld [vmem:[%s4 + $0x38] sm:$0xf]
  %v295 = vld [vmem:[%s4 + $0x3c] sm:$0xff]
  %v296 = vld [vmem:[%s4 + $0x44] sm:$0xf]
  %v297 = vld [vmem:[%s4 + $0x48] sm:$0xff]
  %v298 = vld [vmem:[%s4 + $0x50] sm:$0xf]
  %v299 = vld [vmem:[%s4 + $0x54] sm:$0xff]
  %v300 = vld [vmem:[%s4 + $0x5c] sm:$0xf]
  %v301 = vld [vmem:[%s4 + $0x60] sm:$0xff]
  %v302 = vld [vmem:[%s4 + $0x68] sm:$0xf]
  %v303 = vld [vmem:[%s4 + $0x6c] sm:$0xff]
  %v304 = vld [vmem:[%s4 + $0x74] sm:$0xf]
  %v305 = vld [vmem:[%s4 + $0x78] sm:$0xff]
  %v306 = vld [vmem:[%s4 + $0x80] sm:$0xf]
  %v307 = vld [vmem:[%s4 + $0x84] sm:$0xff]
  %v308 = vld [vmem:[%s4 + $0x8c] sm:$0xf]
  %v309 = vld [vmem:[%s4 + $0x90] sm:$0xff]
  %v310 = vld [vmem:[%s4 + $0x98] sm:$0xf]
  %v311 = vld [vmem:[%s4 + $0x9c] sm:$0xff]
  %v312 = vld [vmem:[%s4 + $0xa4] sm:$0xf]
  %v313 = vld [vmem:[%s4 + $0xa8] sm:$0xff]
  %v314 = vld [vmem:[%s4 + $0xb0] sm:$0xf]
  %v315 = vld [vmem:[%s4 + $0xb4] sm:$0xff]
  %v316 = vld [vmem:[%s4 + $0xbc] sm:$0xf]
  %v317 = vld [vmem:[%s5] sm:$0x7]
  %v318 = vld [vmem:[#allocation2] sm:$0xff]
  %v319 = vld [vmem:[#allocation2 + $0x8] sm:$0xff]
  %v320 = vld [vmem:[#allocation2 + $0x10] sm:$0xff]
  %v322 = vlaneseq
  %v323 = vshrl.u32 %v322, 7
  %v324 = vsub.s32 0, %v323
  %v325 = vrot.slane %v317, %v324
  %v326 = vlaneseq
  %v327 = vshrl.u32 %v326, 7
  %v328 = vsub.s32 1, %v327
  %v329 = vrot.slane %v317, %v328
  %v330 = vlaneseq
  %v331 = vshrl.u32 %v330, 7
  %v332 = vsub.s32 2, %v331
  %v333 = vrot.slane %v317, %v332
  %v369 = vunpack.c.l.b16 %v285
  %v370 = vunpack.c.h.b16 %v285
  %v371 = vunpack.c.l.b16 %v286
  %v372 = vunpack.c.l.b16 %v287
  %v373 = vunpack.c.h.b16 %v287
  %v374 = vunpack.c.l.b16 %v288
  %v375 = vunpack.c.l.b16 %v289
  %v376 = vunpack.c.h.b16 %v289
  %v377 = vunpack.c.l.b16 %v290
  %v378 = vunpack.c.l.b16 %v291
  %v379 = vunpack.c.h.b16 %v291
  %v380 = vunpack.c.l.b16 %v292
  %v381 = vunpack.c.l.b16 %v293
  %v382 = vunpack.c.h.b16 %v293
  %v383 = vunpack.c.l.b16 %v294
  %v384 = vunpack.c.l.b16 %v295
  %v385 = vunpack.c.h.b16 %v295
  %v386 = vunpack.c.l.b16 %v296
  %v387 = vunpack.c.l.b16 %v297
  %v388 = vunpack.c.h.b16 %v297
  %v389 = vunpack.c.l.b16 %v298
  %v390 = vunpack.c.l.b16 %v299
  %v391 = vunpack.c.h.b16 %v299
  %v392 = vunpack.c.l.b16 %v300
  %v393 = vunpack.c.l.b16 %v301
  %v394 = vunpack.c.h.b16 %v301
  %v395 = vunpack.c.l.b16 %v302
  %v396 = vunpack.c.l.b16 %v303
  %v397 = vunpack.c.h.b16 %v303
  %v398 = vunpack.c.l.b16 %v304
  %v399 = vunpack.c.l.b16 %v305
  %v400 = vunpack.c.h.b16 %v305
  %v401 = vunpack.c.l.b16 %v306
  %v402 = vunpack.c.l.b16 %v307
  %v403 = vunpack.c.h.b16 %v307
  %v404 = vunpack.c.l.b16 %v308
  %v405 = vunpack.c.l.b16 %v309
  %v406 = vunpack.c.h.b16 %v309
  %v407 = vunpack.c.l.b16 %v310
  %v408 = vunpack.c.l.b16 %v311
  %v409 = vunpack.c.h.b16 %v311
  %v410 = vunpack.c.l.b16 %v312
  %v411 = vunpack.c.l.b16 %v313
  %v412 = vunpack.c.h.b16 %v313
  %v413 = vunpack.c.l.b16 %v314
  %v414 = vunpack.c.l.b16 %v315
  %v415 = vunpack.c.h.b16 %v315
  %v416 = vunpack.c.l.b16 %v316
  %v417 = vpack.c.b16 %v372, %v369
  %v418 = vpack.c.b16 %v373, %v370
  %v419 = vpack.c.b16 %v374, %v371
  %v420 = vpack.c.b16 %v378, %v375
  %v421 = vpack.c.b16 %v379, %v376
  %v422 = vpack.c.b16 %v380, %v377
  %v423 = vpack.c.b16 %v384, %v381
  %v424 = vpack.c.b16 %v385, %v382
  %v425 = vpack.c.b16 %v386, %v383
  %v426 = vpack.c.b16 %v390, %v387
  %v427 = vpack.c.b16 %v391, %v388
  %v428 = vpack.c.b16 %v392, %v389
  %v429 = vpack.c.b16 %v396, %v393
  %v430 = vpack.c.b16 %v397, %v394
  %v431 = vpack.c.b16 %v398, %v395
  %v432 = vpack.c.b16 %v402, %v399
  %v433 = vpack.c.b16 %v403, %v400
  %v434 = vpack.c.b16 %v404, %v401
  %v435 = vpack.c.b16 %v408, %v405
  %v436 = vpack.c.b16 %v409, %v406
  %v437 = vpack.c.b16 %v410, %v407
  %v438 = vpack.c.b16 %v414, %v411
  %v439 = vpack.c.b16 %v415, %v412
  %v440 = vpack.c.b16 %v416, %v413
  %465 = vmatprep.subr.bf16.mxu0 %v418
  %466 = vmatpush1.bf16.msra.mxu0 %v417
  %467 = vmatprep.subr.bf16.mxu0 %v421
  %468 = vmatpush1.bf16.msra.mxu0 %v420
  %469 = vmatprep.subr.bf16.mxu0 %v424
  %470 = vmatpush1.bf16.msra.mxu0 %v423
  %471 = vmatprep.subr.bf16.mxu0 %v427
  %472 = vmatpush1.bf16.msra.mxu0 %v426
  %473 = vmatprep.subr.bf16.mxu0 %v430
  %474 = vmatpush1.bf16.msra.mxu0 %v429
  %475 = vmatprep.subr.bf16.mxu0 %v433
  %476 = vmatpush1.bf16.msra.mxu0 %v432
  %477 = vmatprep.subr.bf16.mxu0 %v436
  %478 = vmatpush1.bf16.msra.mxu0 %v435
  %479 = vmatprep.subr.bf16.mxu0 %v439
  %480 = vmatpush1.bf16.msra.mxu0 %v438
  %481 = vmatprep.subr.bf16.mxu0 0
  %482 = vmatpush1.bf16.msra.mxu0 0
  %483 = vmatprep.subr.bf16.mxu0 0
  %484 = vmatpush1.bf16.msra.mxu0 0
  %485 = vmatprep.subr.bf16.mxu0 0
  %486 = vmatpush1.bf16.msra.mxu0 0
  %487 = vmatprep.subr.bf16.mxu0 0
  %488 = vmatpush1.bf16.msra.mxu0 0
  %489 = vmatprep.subr.bf16.mxu0 0
  %490 = vmatpush1.bf16.msra.mxu0 0
  %491 = vmatprep.subr.bf16.mxu0 0
  %492 = vmatpush1.bf16.msra.mxu0 0
  %493 = vmatprep.subr.bf16.mxu0 0
  %494 = vmatpush1.bf16.msra.mxu0 0
  %495 = vmatprep.subr.bf16.mxu0 0
  %496 = vmatpush1.bf16.msra.mxu0 0
  %497 = vmatprep.mubr.bf16.mxu0 0
  %498 = vmatmul.mubr.bf16.gmra.mrb[0].mxu0 0
  %v499 = vpop.f32.mrb[0].mxu0
  %v500 = vadd.f32 %v325, %v499
  %v501 = vpop.f32.mrb[0].mxu0
  %v502 = vadd.f32 %v329, %v501
  %v503 = vpop.f32.mrb[0].mxu0
  %v504 = vpop.f32.mrb[0].mxu0
  %505 = vdwg.mxu0
  %506 = vmatprep.subr.bf16.mxu0 0
  %507 = vmatpush1.bf16.msra.mxu0 %v419
  %508 = vmatprep.subr.bf16.mxu0 0
  %509 = vmatpush1.bf16.msra.mxu0 %v422
  %510 = vmatprep.subr.bf16.mxu0 0
  %511 = vmatpush1.bf16.msra.mxu0 %v425
  %512 = vmatprep.subr.bf16.mxu0 0
  %513 = vmatpush1.bf16.msra.mxu0 %v428
  %514 = vmatprep.subr.bf16.mxu0 0
  %515 = vmatpush1.bf16.msra.mxu0 %v431
  %516 = vmatprep.subr.bf16.mxu0 0
  %517 = vmatpush1.bf16.msra.mxu0 %v434
  %518 = vmatprep.subr.bf16.mxu0 0
  %519 = vmatpush1.bf16.msra.mxu0 %v437
  %520 = vmatprep.subr.bf16.mxu0 0
  %521 = vmatpush1.bf16.msra.mxu0 %v440
  %522 = vmatprep.subr.bf16.mxu0 0
  %523 = vmatpush1.bf16.msra.mxu0 0
  %524 = vmatprep.subr.bf16.mxu0 0
  %525 = vmatpush1.bf16.msra.mxu0 0
  %526 = vmatprep.subr.bf16.mxu0 0
  %527 = vmatpush1.bf16.msra.mxu0 0
  %528 = vmatprep.subr.bf16.mxu0 0
  %529 = vmatpush1.bf16.msra.mxu0 0
  %530 = vmatprep.subr.bf16.mxu0 0
  %531 = vmatpush1.bf16.msra.mxu0 0
  %532 = vmatprep.subr.bf16.mxu0 0
  %533 = vmatpush1.bf16.msra.mxu0 0
  %534 = vmatprep.subr.bf16.mxu0 0
  %535 = vmatpush1.bf16.msra.mxu0 0
  %536 = vmatprep.subr.bf16.mxu0 0
  %537 = vmatpush1.bf16.msra.mxu0 0
  %538 = vmatprep.mubr.bf16.mxu0 0
  %539 = vmatmul.mubr.bf16.gmra.mrb[0].mxu0 0
  %v540 = vpop.f32.mrb[0].mxu0
  %v541 = vadd.f32 %v333, %v540
  %v542 = vpop.f32.mrb[0].mxu0
  %v543 = vpop.f32.mrb[0].mxu0
  %v544 = vpop.f32.mrb[0].mxu0
  %545 = vdwg.mxu0
  %v546 = vadd.f32 %v318, %v500
  %v547 = vxor.u32 %v546, 2147483648
  %v548 = vmul.f32 %v547, 1.442695
  %v549 = vpow.pop %v548
  %v550 = vadd.f32 %v549, 1.0
  %v551 = vrcp.pop %v550
  %v552 = vmul.f32 1.0, %v551
  %v553 = vadd.f32 %v319, %v502
  %v554 = vxor.u32 %v553, 2147483648
  %v555 = vmul.f32 %v554, 1.442695
  %v556 = vpow.pop %v555
  %v557 = vadd.f32 %v556, 1.0
  %v558 = vrcp.pop %v557
  %v559 = vmul.f32 1.0, %v558
  %v560 = vmul.f32 %v552, %v541
  %v561 = vadd.f32 %v320, %v560
  %v562 = vtanh.pop %v561
  %v563 = vsub.f32 1.0, %v559
  %v564 = vmul.f32 %v563, %v562
  %v565 = vmul.f32 %v559, 0.0
  %v566 = vadd.f32 %v564, %v565
  %vm567 = vcmp.eq.s32.totalorder %v284, 0
  %v568 = vsel %vm567, 1, 0
  %569 = vset.pattern.permute.xlu0 0
  %570 = vperm.xlu0 %569, %v568
  %v571 = vpop.permute.xlu0 %570
  %vm572 = vcmp.eq.s32.totalorder %v571, 1
  %v573 = vsel %vm572, %v566, 0.0
  %v574 = vld [vmem:[#allocation2 + $0x18] sm:$0xff]
  %v575 = vld [vmem:[#allocation2 + $0x20] sm:$0xff]
  %v576 = vld [vmem:[#allocation2 + $0x28] sm:$0xff]
  %v577 = vpack.c.bf16 %v566, %v566
  %578 = vmatprep.subr.bf16.mxu0 %v418
  %579 = vmatpush1.bf16.msra.mxu0 %v417
  %580 = vmatprep.subr.bf16.mxu0 %v421
  %581 = vmatpush1.bf16.msra.mxu0 %v420
  %582 = vmatprep.subr.bf16.mxu0 %v424
  %583 = vmatpush1.bf16.msra.mxu0 %v423
  %584 = vmatprep.subr.bf16.mxu0 %v427
  %585 = vmatpush1.bf16.msra.mxu0 %v426
  %586 = vmatprep.subr.bf16.mxu0 %v430
  %587 = vmatpush1.bf16.msra.mxu0 %v429
  %588 = vmatprep.subr.bf16.mxu0 %v433
  %589 = vmatpush1.bf16.msra.mxu0 %v432
  %590 = vmatprep.subr.bf16.mxu0 %v436
  %591 = vmatpush1.bf16.msra.mxu0 %v435
  %592 = vmatprep.subr.bf16.mxu0 %v439
  %593 = vmatpush1.bf16.msra.mxu0 %v438
  %594 = vmatprep.subr.bf16.mxu0 0
  %595 = vmatpush1.bf16.msra.mxu0 0
  %596 = vmatprep.subr.bf16.mxu0 0
  %597 = vmatpush1.bf16.msra.mxu0 0
  %598 = vmatprep.subr.bf16.mxu0 0
  %599 = vmatpush1.bf16.msra.mxu0 0
  %600 = vmatprep.subr.bf16.mxu0 0
  %601 = vmatpush1.bf16.msra.mxu0 0
  %602 = vmatprep.subr.bf16.mxu0 0
  %603 = vmatpush1.bf16.msra.mxu0 0
  %604 = vmatprep.subr.bf16.mxu0 0
  %605 = vmatpush1.bf16.msra.mxu0 0
  %606 = vmatprep.subr.bf16.mxu0 0
  %607 = vmatpush1.bf16.msra.mxu0 0
  %608 = vmatprep.subr.bf16.mxu0 0
  %609 = vmatpush1.bf16.msra.mxu0 0
  %610 = vmatprep.mubr.bf16.mxu0 0
  %611 = vmatmul.mubr.bf16.gmra.mrb[0].mxu0 %v577
  %v612 = vpop.f32.mrb[0].mxu0
  %v613 = vadd.f32 %v325, %v612
  %v614 = vpop.f32.mrb[0].mxu0
  %v615 = vadd.f32 %v329, %v614
  %v616 = vpop.f32.mrb[0].mxu0
  %v617 = vpop.f32.mrb[0].mxu0
  %618 = vdwg.mxu0
  %619 = vmatprep.subr.bf16.mxu0 0
  %620 = vmatpush1.bf16.msra.mxu0 %v419
  %621 = vmatprep.subr.bf16.mxu0 0
  %622 = vmatpush1.bf16.msra.mxu0 %v422
  %623 = vmatprep.subr.bf16.mxu0 0
  %624 = vmatpush1.bf16.msra.mxu0 %v425
  %625 = vmatprep.subr.bf16.mxu0 0
  %626 = vmatpush1.bf16.msra.mxu0 %v428
  %627 = vmatprep.subr.bf16.mxu0 0
  %628 = vmatpush1.bf16.msra.mxu0 %v431
  %629 = vmatprep.subr.bf16.mxu0 0
  %630 = vmatpush1.bf16.msra.mxu0 %v434
  %631 = vmatprep.subr.bf16.mxu0 0
  %632 = vmatpush1.bf16.msra.mxu0 %v437
  %633 = vmatprep.subr.bf16.mxu0 0
  %634 = vmatpush1.bf16.msra.mxu0 %v440
  %635 = vmatprep.subr.bf16.mxu0 0
  %636 = vmatpush1.bf16.msra.mxu0 0
  %637 = vmatprep.subr.bf16.mxu0 0
  %638 = vmatpush1.bf16.msra.mxu0 0
  %639 = vmatprep.subr.bf16.mxu0 0
  %640 = vmatpush1.bf16.msra.mxu0 0
  %641 = vmatprep.subr.bf16.mxu0 0
  %642 = vmatpush1.bf16.msra.mxu0 0
  %643 = vmatprep.subr.bf16.mxu0 0
  %644 = vmatpush1.bf16.msra.mxu0 0
  %645 = vmatprep.subr.bf16.mxu0 0
  %646 = vmatpush1.bf16.msra.mxu0 0
  %647 = vmatprep.subr.bf16.mxu0 0
  %648 = vmatpush1.bf16.msra.mxu0 0
  %649 = vmatprep.subr.bf16.mxu0 0
  %650 = vmatpush1.bf16.msra.mxu0 0
  %651 = vmatprep.mubr.bf16.mxu0 0
  %652 = vmatmul.mubr.bf16.gmra.mrb[0].mxu0 %v577
  %v653 = vpop.f32.mrb[0].mxu0
  %v654 = vadd.f32 %v333, %v653
  %v655 = vpop.f32.mrb[0].mxu0
  %v656 = vpop.f32.mrb[0].mxu0
  %v657 = vpop.f32.mrb[0].mxu0
  %658 = vdwg.mxu0
  %v659 = vadd.f32 %v574, %v613
  %v660 = vxor.u32 %v659, 2147483648
  %v661 = vmul.f32 %v660, 1.442695
  %v662 = vpow.pop %v661
  %v663 = vadd.f32 %v662, 1.0
  %v664 = vrcp.pop %v663
  %v665 = vmul.f32 1.0, %v664
  %v666 = vadd.f32 %v575, %v615
  %v667 = vxor.u32 %v666, 2147483648
  %v668 = vmul.f32 %v667, 1.442695
  %v669 = vpow.pop %v668
  %v670 = vadd.f32 %v669, 1.0
  %v671 = vrcp.pop %v670
  %v672 = vmul.f32 1.0, %v671
  %v673 = vmul.f32 %v665, %v654
  %v674 = vadd.f32 %v576, %v673
  %v675 = vtanh.pop %v674
  %v676 = vsub.f32 1.0, %v672
  %v677 = vmul.f32 %v676, %v675
  %v678 = vmul.f32 %v672, %v566
  %v679 = vadd.f32 %v677, %v678
  %vm680 = vcmp.eq.s32.totalorder %v284, 1
  %v681 = vsel %vm680, 1, 0
  %682 = vset.pattern.permute.xlu0 0
  %683 = vperm.xlu0 %682, %v681
  %v684 = vpop.permute.xlu0 %683
  %vm685 = vcmp.eq.s32.totalorder %v684, 1
  %v686 = vsel %vm685, %v679, %v573
  %v687 = vld [vmem:[#allocation2 + $0x30] sm:$0xff]
  %v688 = vld [vmem:[#allocation2 + $0x38] sm:$0xff]
  %v689 = vld [vmem:[#allocation2 + $0x40] sm:$0xff]
  %v690 = vpack.c.bf16 %v679, %v679
  %691 = vmatprep.subr.bf16.mxu0 %v418
  %692 = vmatpush1.bf16.msra.mxu0 %v417
  %693 = vmatprep.subr.bf16.mxu0 %v421
  %694 = vmatpush1.bf16.msra.mxu0 %v420
  %695 = vmatprep.subr.bf16.mxu0 %v424
  %696 = vmatpush1.bf16.msra.mxu0 %v423
  %697 = vmatprep.subr.bf16.mxu0 %v427
  %698 = vmatpush1.bf16.msra.mxu0 %v426
  %699 = vmatprep.subr.bf16.mxu0 %v430
  %700 = vmatpush1.bf16.msra.mxu0 %v429
  %701 = vmatprep.subr.bf16.mxu0 %v433
  %702 = vmatpush1.bf16.msra.mxu0 %v432
  %703 = vmatprep.subr.bf16.mxu0 %v436
  %704 = vmatpush1.bf16.msra.mxu0 %v435
  %705 = vmatprep.subr.bf16.mxu0 %v439
  %706 = vmatpush1.bf16.msra.mxu0 %v438
  %707 = vmatprep.subr.bf16.mxu0 0
  %708 = vmatpush1.bf16.msra.mxu0 0
  %709 = vmatprep.subr.bf16.mxu0 0
  %710 = vmatpush1.bf16.msra.mxu0 0
  %711 = vmatprep.subr.bf16.mxu0 0
  %712 = vmatpush1.bf16.msra.mxu0 0
  %713 = vmatprep.subr.bf16.mxu0 0
  %714 = vmatpush1.bf16.msra.mxu0 0
  %715 = vmatprep.subr.bf16.mxu0 0
  %716 = vmatpush1.bf16.msra.mxu0 0
  %717 = vmatprep.subr.bf16.mxu0 0
  %718 = vmatpush1.bf16.msra.mxu0 0
  %719 = vmatprep.subr.bf16.mxu0 0
  %720 = vmatpush1.bf16.msra.mxu0 0
  %721 = vmatprep.subr.bf16.mxu0 0
  %722 = vmatpush1.bf16.msra.mxu0 0
  %723 = vmatprep.mubr.bf16.mxu0 0
  %724 = vmatmul.mubr.bf16.gmra.mrb[0].mxu0 %v690
  %v725 = vpop.f32.mrb[0].mxu0
  %v726 = vadd.f32 %v325, %v725
  %v727 = vpop.f32.mrb[0].mxu0
  %v728 = vadd.f32 %v329, %v727
  %v729 = vpop.f32.mrb[0].mxu0
  %v730 = vpop.f32.mrb[0].mxu0
  %731 = vdwg.mxu0
  %732 = vmatprep.subr.bf16.mxu0 0
  %733 = vmatpush1.bf16.msra.mxu0 %v419
  %734 = vmatprep.subr.bf16.mxu0 0
  %735 = vmatpush1.bf16.msra.mxu0 %v422
  %736 = vmatprep.subr.bf16.mxu0 0
  %737 = vmatpush1.bf16.msra.mxu0 %v425
  %738 = vmatprep.subr.bf16.mxu0 0
  %739 = vmatpush1.bf16.msra.mxu0 %v428
  %740 = vmatprep.subr.bf16.mxu0 0
  %741 = vmatpush1.bf16.msra.mxu0 %v431
  %742 = vmatprep.subr.bf16.mxu0 0
  %743 = vmatpush1.bf16.msra.mxu0 %v434
  %744 = vmatprep.subr.bf16.mxu0 0
  %745 = vmatpush1.bf16.msra.mxu0 %v437
  %746 = vmatprep.subr.bf16.mxu0 0
  %747 = vmatpush1.bf16.msra.mxu0 %v440
  %748 = vmatprep.subr.bf16.mxu0 0
  %749 = vmatpush1.bf16.msra.mxu0 0
  %750 = vmatprep.subr.bf16.mxu0 0
  %751 = vmatpush1.bf16.msra.mxu0 0
  %752 = vmatprep.subr.bf16.mxu0 0
  %753 = vmatpush1.bf16.msra.mxu0 0
  %754 = vmatprep.subr.bf16.mxu0 0
  %755 = vmatpush1.bf16.msra.mxu0 0
  %756 = vmatprep.subr.bf16.mxu0 0
  %757 = vmatpush1.bf16.msra.mxu0 0
  %758 = vmatprep.subr.bf16.mxu0 0
  %759 = vmatpush1.bf16.msra.mxu0 0
  %760 = vmatprep.subr.bf16.mxu0 0
  %761 = vmatpush1.bf16.msra.mxu0 0
  %762 = vmatprep.subr.bf16.mxu0 0
  %763 = vmatpush1.bf16.msra.mxu0 0
  %764 = vmatprep.mubr.bf16.mxu0 0
  %765 = vmatmul.mubr.bf16.gmra.mrb[0].mxu0 %v690
  %v766 = vpop.f32.mrb[0].mxu0
  %v767 = vadd.f32 %v333, %v766
  %v768 = vpop.f32.mrb[0].mxu0
  %v769 = vpop.f32.mrb[0].mxu0
  %v770 = vpop.f32.mrb[0].mxu0
  %771 = vdwg.mxu0
  %v772 = vadd.f32 %v687, %v726
  %v773 = vxor.u32 %v772, 2147483648
  %v774 = vmul.f32 %v773, 1.442695
  %v775 = vpow.pop %v774
  %v776 = vadd.f32 %v775, 1.0
  %v777 = vrcp.pop %v776
  %v778 = vmul.f32 1.0, %v777
  %v779 = vadd.f32 %v688, %v728
  %v780 = vxor.u32 %v779, 2147483648
  %v781 = vmul.f32 %v780, 1.442695
  %v782 = vpow.pop %v781
  %v783 = vadd.f32 %v782, 1.0
  %v784 = vrcp.pop %v783
  %v785 = vmul.f32 1.0, %v784
  %v786 = vmul.f32 %v778, %v767
  %v787 = vadd.f32 %v689, %v786
  %v788 = vtanh.pop %v787
  %v789 = vsub.f32 1.0, %v785
  %v790 = vmul.f32 %v789, %v788
  %v791 = vmul.f32 %v785, %v679
  %v792 = vadd.f32 %v790, %v791
  %vm793 = vcmp.eq.s32.totalorder %v284, 2
  %v794 = vsel %vm793, 1, 0
  %795 = vset.pattern.permute.xlu0 0
  %796 = vperm.xlu0 %795, %v794
  %v797 = vpop.permute.xlu0 %796
  %vm798 = vcmp.eq.s32.totalorder %v797, 1
  %v799 = vsel %vm798, %v792, %v686
  %v800 = vld [vmem:[#allocation2 + $0x48] sm:$0xff]
  %v801 = vld [vmem:[#allocation2 + $0x50] sm:$0xff]
  %v802 = vld [vmem:[#allocation2 + $0x58] sm:$0xff]
  %v803 = vpack.c.bf16 %v792, %v792
  %804 = vmatprep.subr.bf16.mxu0 %v418
  %805 = vmatpush1.bf16.msra.mxu0 %v417
  %806 = vmatprep.subr.bf16.mxu0 %v421
  %807 = vmatpush1.bf16.msra.mxu0 %v420
  %808 = vmatprep.subr.bf16.mxu0 %v424
  %809 = vmatpush1.bf16.msra.mxu0 %v423
  %810 = vmatprep.subr.bf16.mxu0 %v427
  %811 = vmatpush1.bf16.msra.mxu0 %v426
  %812 = vmatprep.subr.bf16.mxu0 %v430
  %813 = vmatpush1.bf16.msra.mxu0 %v429
  %814 = vmatprep.subr.bf16.mxu0 %v433
  %815 = vmatpush1.bf16.msra.mxu0 %v432
  %816 = vmatprep.subr.bf16.mxu0 %v436
  %817 = vmatpush1.bf16.msra.mxu0 %v435
  %818 = vmatprep.subr.bf16.mxu0 %v439
  %819 = vmatpush1.bf16.msra.mxu0 %v438
  %820 = vmatprep.subr.bf16.mxu0 0
  %821 = vmatpush1.bf16.msra.mxu0 0
  %822 = vmatprep.subr.bf16.mxu0 0
  %823 = vmatpush1.bf16.msra.mxu0 0
  %824 = vmatprep.subr.bf16.mxu0 0
  %825 = vmatpush1.bf16.msra.mxu0 0
  %826 = vmatprep.subr.bf16.mxu0 0
  %827 = vmatpush1.bf16.msra.mxu0 0
  %828 = vmatprep.subr.bf16.mxu0 0
  %829 = vmatpush1.bf16.msra.mxu0 0
  %830 = vmatprep.subr.bf16.mxu0 0
  %831 = vmatpush1.bf16.msra.mxu0 0
  %832 = vmatprep.subr.bf16.mxu0 0
  %833 = vmatpush1.bf16.msra.mxu0 0
  %834 = vmatprep.subr.bf16.mxu0 0
  %835 = vmatpush1.bf16.msra.mxu0 0
  %836 = vmatprep.mubr.bf16.mxu0 0
  %837 = vmatmul.mubr.bf16.gmra.mrb[0].mxu0 %v803
  %v838 = vpop.f32.mrb[0].mxu0
  %v839 = vadd.f32 %v325, %v838
  %v840 = vpop.f32.mrb[0].mxu0
  %v841 = vadd.f32 %v329, %v840
  %v842 = vpop.f32.mrb[0].mxu0
  %v843 = vpop.f32.mrb[0].mxu0
  %844 = vdwg.mxu0
  %845 = vmatprep.subr.bf16.mxu0 0
  %846 = vmatpush1.bf16.msra.mxu0 %v419
  %847 = vmatprep.subr.bf16.mxu0 0
  %848 = vmatpush1.bf16.msra.mxu0 %v422
  %849 = vmatprep.subr.bf16.mxu0 0
  %850 = vmatpush1.bf16.msra.mxu0 %v425
  %851 = vmatprep.subr.bf16.mxu0 0
  %852 = vmatpush1.bf16.msra.mxu0 %v428
  %853 = vmatprep.subr.bf16.mxu0 0
  %854 = vmatpush1.bf16.msra.mxu0 %v431
  %855 = vmatprep.subr.bf16.mxu0 0
  %856 = vmatpush1.bf16.msra.mxu0 %v434
  %857 = vmatprep.subr.bf16.mxu0 0
  %858 = vmatpush1.bf16.msra.mxu0 %v437
  %859 = vmatprep.subr.bf16.mxu0 0
  %860 = vmatpush1.bf16.msra.mxu0 %v440
  %861 = vmatprep.subr.bf16.mxu0 0
  %862 = vmatpush1.bf16.msra.mxu0 0
  %863 = vmatprep.subr.bf16.mxu0 0
  %864 = vmatpush1.bf16.msra.mxu0 0
  %865 = vmatprep.subr.bf16.mxu0 0
  %866 = vmatpush1.bf16.msra.mxu0 0
  %867 = vmatprep.subr.bf16.mxu0 0
  %868 = vmatpush1.bf16.msra.mxu0 0
  %869 = vmatprep.subr.bf16.mxu0 0
  %870 = vmatpush1.bf16.msra.mxu0 0
  %871 = vmatprep.subr.bf16.mxu0 0
  %872 = vmatpush1.bf16.msra.mxu0 0
  %873 = vmatprep.subr.bf16.mxu0 0
  %874 = vmatpush1.bf16.msra.mxu0 0
  %875 = vmatprep.subr.bf16.mxu0 0
  %876 = vmatpush1.bf16.msra.mxu0 0
  %877 = vmatprep.mubr.bf16.mxu0 0
  %878 = vmatmul.mubr.bf16.gmra.mrb[0].mxu0 %v803
  %v879 = vpop.f32.mrb[0].mxu0
  %v880 = vadd.f32 %v333, %v879
  %v881 = vpop.f32.mrb[0].mxu0
  %v882 = vpop.f32.mrb[0].mxu0
  %v883 = vpop.f32.mrb[0].mxu0
  %884 = vdwg.mxu0
  %v885 = vadd.f32 %v800, %v839
  %v886 = vxor.u32 %v885, 2147483648
  %v887 = vmul.f32 %v886, 1.442695
  %v888 = vpow.pop %v887
  %v889 = vadd.f32 %v888, 1.0
  %v890 = vrcp.pop %v889
  %v891 = vmul.f32 1.0, %v890
  %v892 = vadd.f32 %v801, %v841
  %v893 = vxor.u32 %v892, 2147483648
  %v894 = vmul.f32 %v893, 1.442695
  %v895 = vpow.pop %v894
  %v896 = vadd.f32 %v895, 1.0
  %v897 = vrcp.pop %v896
  %v898 = vmul.f32 1.0, %v897
  %v899 = vmul.f32 %v891, %v880
  %v900 = vadd.f32 %v802, %v899
  %v901 = vtanh.pop %v900
  %v902 = vsub.f32 1.0, %v898
  %v903 = vmul.f32 %v902, %v901
  %v904 = vmul.f32 %v898, %v792
  %v905 = vadd.f32 %v903, %v904
  %vm906 = vcmp.eq.s32.totalorder %v284, 3
  %v907 = vsel %vm906, 1, 0
  %908 = vset.pattern.permute.xlu0 0
  %909 = vperm.xlu0 %908, %v907
  %v910 = vpop.permute.xlu0 %909
  %vm911 = vcmp.eq.s32.totalorder %v910, 1
  %v912 = vsel %vm911, %v905, %v799
  %v913 = vld [vmem:[#allocation2 + $0x60] sm:$0xff]
  %v914 = vld [vmem:[#allocation2 + $0x68] sm:$0xff]
  %v915 = vld [vmem:[#allocation2 + $0x70] sm:$0xff]
  %v916 = vpack.c.bf16 %v905, %v905
  %917 = vmatprep.subr.bf16.mxu0 %v418
  %918 = vmatpush1.bf16.msra.mxu0 %v417
  %919 = vmatprep.subr.bf16.mxu0 %v421
  %920 = vmatpush1.bf16.msra.mxu0 %v420
  %921 = vmatprep.subr.bf16.mxu0 %v424
  %922 = vmatpush1.bf16.msra.mxu0 %v423
  %923 = vmatprep.subr.bf16.mxu0 %v427
  %924 = vmatpush1.bf16.msra.mxu0 %v426
  %925 = vmatprep.subr.bf16.mxu0 %v430
  %926 = vmatpush1.bf16.msra.mxu0 %v429
  %927 = vmatprep.subr.bf16.mxu0 %v433
  %928 = vmatpush1.bf16.msra.mxu0 %v432
  %929 = vmatprep.subr.bf16.mxu0 %v436
  %930 = vmatpush1.bf16.msra.mxu0 %v435
  %931 = vmatprep.subr.bf16.mxu0 %v439
  %932 = vmatpush1.bf16.msra.mxu0 %v438
  %933 = vmatprep.subr.bf16.mxu0 0
  %934 = vmatpush1.bf16.msra.mxu0 0
  %935 = vmatprep.subr.bf16.mxu0 0
  %936 = vmatpush1.bf16.msra.mxu0 0
  %937 = vmatprep.subr.bf16.mxu0 0
  %938 = vmatpush1.bf16.msra.mxu0 0
  %939 = vmatprep.subr.bf16.mxu0 0
  %940 = vmatpush1.bf16.msra.mxu0 0
  %941 = vmatprep.subr.bf16.mxu0 0
  %942 = vmatpush1.bf16.msra.mxu0 0
  %943 = vmatprep.subr.bf16.mxu0 0
  %944 = vmatpush1.bf16.msra.mxu0 0
  %945 = vmatprep.subr.bf16.mxu0 0
  %946 = vmatpush1.bf16.msra.mxu0 0
  %947 = vmatprep.subr.bf16.mxu0 0
  %948 = vmatpush1.bf16.msra.mxu0 0
  %949 = vmatprep.mubr.bf16.mxu0 0
  %950 = vmatmul.mubr.bf16.gmra.mrb[0].mxu0 %v916
  %v951 = vpop.f32.mrb[0].mxu0
  %v952 = vadd.f32 %v325, %v951
  %v953 = vpop.f32.mrb[0].mxu0
  %v954 = vadd.f32 %v329, %v953
  %v955 = vpop.f32.mrb[0].mxu0
  %v956 = vpop.f32.mrb[0].mxu0
  %957 = vdwg.mxu0
  %958 = vmatprep.subr.bf16.mxu0 0
  %959 = vmatpush1.bf16.msra.mxu0 %v419
  %960 = vmatprep.subr.bf16.mxu0 0
  %961 = vmatpush1.bf16.msra.mxu0 %v422
  %962 = vmatprep.subr.bf16.mxu0 0
  %963 = vmatpush1.bf16.msra.mxu0 %v425
  %964 = vmatprep.subr.bf16.mxu0 0
  %965 = vmatpush1.bf16.msra.mxu0 %v428
  %966 = vmatprep.subr.bf16.mxu0 0
  %967 = vmatpush1.bf16.msra.mxu0 %v431
  %968 = vmatprep.subr.bf16.mxu0 0
  %969 = vmatpush1.bf16.msra.mxu0 %v434
  %970 = vmatprep.subr.bf16.mxu0 0
  %971 = vmatpush1.bf16.msra.mxu0 %v437
  %972 = vmatprep.subr.bf16.mxu0 0
  %973 = vmatpush1.bf16.msra.mxu0 %v440
  %974 = vmatprep.subr.bf16.mxu0 0
  %975 = vmatpush1.bf16.msra.mxu0 0
  %976 = vmatprep.subr.bf16.mxu0 0
  %977 = vmatpush1.bf16.msra.mxu0 0
  %978 = vmatprep.subr.bf16.mxu0 0
  %979 = vmatpush1.bf16.msra.mxu0 0
  %980 = vmatprep.subr.bf16.mxu0 0
  %981 = vmatpush1.bf16.msra.mxu0 0
  %982 = vmatprep.subr.bf16.mxu0 0
  %983 = vmatpush1.bf16.msra.mxu0 0
  %984 = vmatprep.subr.bf16.mxu0 0
  %985 = vmatpush1.bf16.msra.mxu0 0
  %986 = vmatprep.subr.bf16.mxu0 0
  %987 = vmatpush1.bf16.msra.mxu0 0
  %988 = vmatprep.subr.bf16.mxu0 0
  %989 = vmatpush1.bf16.msra.mxu0 0
  %990 = vmatprep.mubr.bf16.mxu0 0
  %991 = vmatmul.mubr.bf16.gmra.mrb[0].mxu0 %v916
  %v992 = vpop.f32.mrb[0].mxu0
  %v993 = vadd.f32 %v333, %v992
  %v994 = vpop.f32.mrb[0].mxu0
  %v995 = vpop.f32.mrb[0].mxu0
  %v996 = vpop.f32.mrb[0].mxu0
  %997 = vdwg.mxu0
  %v998 = vadd.f32 %v913, %v952
  %v999 = vxor.u32 %v998, 2147483648
  %v1000 = vmul.f32 %v999, 1.442695
  %v1001 = vpow.pop %v1000
  %v1002 = vadd.f32 %v1001, 1.0
  %v1003 = vrcp.pop %v1002
  %v1004 = vmul.f32 1.0, %v1003
  %v1005 = vadd.f32 %v914, %v954
  %v1006 = vxor.u32 %v1005, 2147483648
  %v1007 = vmul.f32 %v1006, 1.442695
  %v1008 = vpow.pop %v1007
  %v1009 = vadd.f32 %v1008, 1.0
  %v1010 = vrcp.pop %v1009
  %v1011 = vmul.f32 1.0, %v1010
  %v1012 = vmul.f32 %v1004, %v993
  %v1013 = vadd.f32 %v915, %v1012
  %v1014 = vtanh.pop %v1013
  %v1015 = vsub.f32 1.0, %v1011
  %v1016 = vmul.f32 %v1015, %v1014
  %v1017 = vmul.f32 %v1011, %v905
  %v1018 = vadd.f32 %v1016, %v1017
  %vm1019 = vcmp.eq.s32.totalorder %v284, 4
  %v1020 = vsel %vm1019, 1, 0
  %1021 = vset.pattern.permute.xlu0 0
  %1022 = vperm.xlu0 %1021, %v1020
  %v1023 = vpop.permute.xlu0 %1022
  %vm1024 = vcmp.eq.s32.totalorder %v1023, 1
  %v1025 = vsel %vm1024, %v1018, %v912
  %v1026 = vld [vmem:[#allocation2 + $0x78] sm:$0xff]
  %v1027 = vld [vmem:[#allocation2 + $0x80] sm:$0xff]
  %v1028 = vld [vmem:[#allocation2 + $0x88] sm:$0xff]
  %v1029 = vpack.c.bf16 %v1018, %v1018
  %1030 = vmatprep.subr.bf16.mxu0 %v418
  %1031 = vmatpush1.bf16.msra.mxu0 %v417
  %1032 = vmatprep.subr.bf16.mxu0 %v421
  %1033 = vmatpush1.bf16.msra.mxu0 %v420
  %1034 = vmatprep.subr.bf16.mxu0 %v424
  %1035 = vmatpush1.bf16.msra.mxu0 %v423
  %1036 = vmatprep.subr.bf16.mxu0 %v427
  %1037 = vmatpush1.bf16.msra.mxu0 %v426
  %1038 = vmatprep.subr.bf16.mxu0 %v430
  %1039 = vmatpush1.bf16.msra.mxu0 %v429
  %1040 = vmatprep.subr.bf16.mxu0 %v433
  %1041 = vmatpush1.bf16.msra.mxu0 %v432
  %1042 = vmatprep.subr.bf16.mxu0 %v436
  %1043 = vmatpush1.bf16.msra.mxu0 %v435
  %1044 = vmatprep.subr.bf16.mxu0 %v439
  %1045 = vmatpush1.bf16.msra.mxu0 %v438
  %1046 = vmatprep.subr.bf16.mxu0 0
  %1047 = vmatpush1.bf16.msra.mxu0 0
  %1048 = vmatprep.subr.bf16.mxu0 0
  %1049 = vmatpush1.bf16.msra.mxu0 0
  %1050 = vmatprep.subr.bf16.mxu0 0
  %1051 = vmatpush1.bf16.msra.mxu0 0
  %1052 = vmatprep.subr.bf16.mxu0 0
  %1053 = vmatpush1.bf16.msra.mxu0 0
  %1054 = vmatprep.subr.bf16.mxu0 0
  %1055 = vmatpush1.bf16.msra.mxu0 0
  %1056 = vmatprep.subr.bf16.mxu0 0
  %1057 = vmatpush1.bf16.msra.mxu0 0
  %1058 = vmatprep.subr.bf16.mxu0 0
  %1059 = vmatpush1.bf16.msra.mxu0 0
  %1060 = vmatprep.subr.bf16.mxu0 0
  %1061 = vmatpush1.bf16.msra.mxu0 0
  %1062 = vmatprep.mubr.bf16.mxu0 0
  %1063 = vmatmul.mubr.bf16.gmra.mrb[0].mxu0 %v1029
  %v1064 = vpop.f32.mrb[0].mxu0
  %v1065 = vadd.f32 %v325, %v1064
  %v1066 = vpop.f32.mrb[0].mxu0
  %v1067 = vadd.f32 %v329, %v1066
  %v1068 = vpop.f32.mrb[0].mxu0
  %v1069 = vpop.f32.mrb[0].mxu0
  %1070 = vdwg.mxu0
  %1071 = vmatprep.subr.bf16.mxu0 0
  %1072 = vmatpush1.bf16.msra.mxu0 %v419
  %1073 = vmatprep.subr.bf16.mxu0 0
  %1074 = vmatpush1.bf16.msra.mxu0 %v422
  %1075 = vmatprep.subr.bf16.mxu0 0
  %1076 = vmatpush1.bf16.msra.mxu0 %v425
  %1077 = vmatprep.subr.bf16.mxu0 0
  %1078 = vmatpush1.bf16.msra.mxu0 %v428
  %1079 = vmatprep.subr.bf16.mxu0 0
  %1080 = vmatpush1.bf16.msra.mxu0 %v431
  %1081 = vmatprep.subr.bf16.mxu0 0
  %1082 = vmatpush1.bf16.msra.mxu0 %v434
  %1083 = vmatprep.subr.bf16.mxu0 0
  %1084 = vmatpush1.bf16.msra.mxu0 %v437
  %1085 = vmatprep.subr.bf16.mxu0 0
  %1086 = vmatpush1.bf16.msra.mxu0 %v440
  %1087 = vmatprep.subr.bf16.mxu0 0
  %1088 = vmatpush1.bf16.msra.mxu0 0
  %1089 = vmatprep.subr.bf16.mxu0 0
  %1090 = vmatpush1.bf16.msra.mxu0 0
  %1091 = vmatprep.subr.bf16.mxu0 0
  %1092 = vmatpush1.bf16.msra.mxu0 0
  %1093 = vmatprep.subr.bf16.mxu0 0
  %1094 = vmatpush1.bf16.msra.mxu0 0
  %1095 = vmatprep.subr.bf16.mxu0 0
  %1096 = vmatpush1.bf16.msra.mxu0 0
  %1097 = vmatprep.subr.bf16.mxu0 0
  %1098 = vmatpush1.bf16.msra.mxu0 0
  %1099 = vmatprep.subr.bf16.mxu0 0
  %1100 = vmatpush1.bf16.msra.mxu0 0
  %1101 = vmatprep.subr.bf16.mxu0 0
  %1102 = vmatpush1.bf16.msra.mxu0 0
  %1103 = vmatprep.mubr.bf16.mxu0 0
  %1104 = vmatmul.mubr.bf16.gmra.mrb[0].mxu0 %v1029
  %v1105 = vpop.f32.mrb[0].mxu0
  %v1106 = vadd.f32 %v333, %v1105
  %v1107 = vpop.f32.mrb[0].mxu0
  %v1108 = vpop.f32.mrb[0].mxu0
  %v1109 = vpop.f32.mrb[0].mxu0
  %1110 = vdwg.mxu0
  %v1111 = vadd.f32 %v1026, %v1065
  %v1112 = vxor.u32 %v1111, 2147483648
  %v1113 = vmul.f32 %v1112, 1.442695
  %v1114 = vpow.pop %v1113
  %v1115 = vadd.f32 %v1114, 1.0
  %v1116 = vrcp.pop %v1115
  %v1117 = vmul.f32 1.0, %v1116
  %v1118 = vadd.f32 %v1027, %v1067
  %v1119 = vxor.u32 %v1118, 2147483648
  %v1120 = vmul.f32 %v1119, 1.442695
  %v1121 = vpow.pop %v1120
  %v1122 = vadd.f32 %v1121, 1.0
  %v1123 = vrcp.pop %v1122
  %v1124 = vmul.f32 1.0, %v1123
  %v1125 = vmul.f32 %v1117, %v1106
  %v1126 = vadd.f32 %v1028, %v1125
  %v1127 = vtanh.pop %v1126
  %v1128 = vsub.f32 1.0, %v1124
  %v1129 = vmul.f32 %v1128, %v1127
  %v1130 = vmul.f32 %v1124, %v1018
  %v1131 = vadd.f32 %v1129, %v1130
  %vm1132 = vcmp.eq.s32.totalorder %v284, 5
  %v1133 = vsel %vm1132, 1, 0
  %1134 = vset.pattern.permute.xlu0 0
  %1135 = vperm.xlu0 %1134, %v1133
  %v1136 = vpop.permute.xlu0 %1135
  %vm1137 = vcmp.eq.s32.totalorder %v1136, 1
  %v1138 = vsel %vm1137, %v1131, %v1025
  %v1139 = vld [vmem:[#allocation2 + $0x90] sm:$0xff]
  %v1140 = vld [vmem:[#allocation2 + $0x98] sm:$0xff]
  %v1141 = vld [vmem:[#allocation2 + $0xa0] sm:$0xff]
  %v1142 = vpack.c.bf16 %v1131, %v1131
  %1143 = vmatprep.subr.bf16.mxu0 %v418
  %1144 = vmatpush1.bf16.msra.mxu0 %v417
  %1145 = vmatprep.subr.bf16.mxu0 %v421
  %1146 = vmatpush1.bf16.msra.mxu0 %v420
  %1147 = vmatprep.subr.bf16.mxu0 %v424
  %1148 = vmatpush1.bf16.msra.mxu0 %v423
  %1149 = vmatprep.subr.bf16.mxu0 %v427
  %1150 = vmatpush1.bf16.msra.mxu0 %v426
  %1151 = vmatprep.subr.bf16.mxu0 %v430
  %1152 = vmatpush1.bf16.msra.mxu0 %v429
  %1153 = vmatprep.subr.bf16.mxu0 %v433
  %1154 = vmatpush1.bf16.msra.mxu0 %v432
  %1155 = vmatprep.subr.bf16.mxu0 %v436
  %1156 = vmatpush1.bf16.msra.mxu0 %v435
  %1157 = vmatprep.subr.bf16.mxu0 %v439
  %1158 = vmatpush1.bf16.msra.mxu0 %v438
  %1159 = vmatprep.subr.bf16.mxu0 0
  %1160 = vmatpush1.bf16.msra.mxu0 0
  %1161 = vmatprep.subr.bf16.mxu0 0
  %1162 = vmatpush1.bf16.msra.mxu0 0
  %1163 = vmatprep.subr.bf16.mxu0 0
  %1164 = vmatpush1.bf16.msra.mxu0 0
  %1165 = vmatprep.subr.bf16.mxu0 0
  %1166 = vmatpush1.bf16.msra.mxu0 0
  %1167 = vmatprep.subr.bf16.mxu0 0
  %1168 = vmatpush1.bf16.msra.mxu0 0
  %1169 = vmatprep.subr.bf16.mxu0 0
  %1170 = vmatpush1.bf16.msra.mxu0 0
  %1171 = vmatprep.subr.bf16.mxu0 0
  %1172 = vmatpush1.bf16.msra.mxu0 0
  %1173 = vmatprep.subr.bf16.mxu0 0
  %1174 = vmatpush1.bf16.msra.mxu0 0
  %1175 = vmatprep.mubr.bf16.mxu0 0
  %1176 = vmatmul.mubr.bf16.gmra.mrb[0].mxu0 %v1142
  %v1177 = vpop.f32.mrb[0].mxu0
  %v1178 = vadd.f32 %v325, %v1177
  %v1179 = vpop.f32.mrb[0].mxu0
  %v1180 = vadd.f32 %v329, %v1179
  %v1181 = vpop.f32.mrb[0].mxu0
  %v1182 = vpop.f32.mrb[0].mxu0
  %1183 = vdwg.mxu0
  %1184 = vmatprep.subr.bf16.mxu0 0
  %1185 = vmatpush1.bf16.msra.mxu0 %v419
  %1186 = vmatprep.subr.bf16.mxu0 0
  %1187 = vmatpush1.bf16.msra.mxu0 %v422
  %1188 = vmatprep.subr.bf16.mxu0 0
  %1189 = vmatpush1.bf16.msra.mxu0 %v425
  %1190 = vmatprep.subr.bf16.mxu0 0
  %1191 = vmatpush1.bf16.msra.mxu0 %v428
  %1192 = vmatprep.subr.bf16.mxu0 0
  %1193 = vmatpush1.bf16.msra.mxu0 %v431
  %1194 = vmatprep.subr.bf16.mxu0 0
  %1195 = vmatpush1.bf16.msra.mxu0 %v434
  %1196 = vmatprep.subr.bf16.mxu0 0
  %1197 = vmatpush1.bf16.msra.mxu0 %v437
  %1198 = vmatprep.subr.bf16.mxu0 0
  %1199 = vmatpush1.bf16.msra.mxu0 %v440
  %1200 = vmatprep.subr.bf16.mxu0 0
  %1201 = vmatpush1.bf16.msra.mxu0 0
  %1202 = vmatprep.subr.bf16.mxu0 0
  %1203 = vmatpush1.bf16.msra.mxu0 0
  %1204 = vmatprep.subr.bf16.mxu0 0
  %1205 = vmatpush1.bf16.msra.mxu0 0
  %1206 = vmatprep.subr.bf16.mxu0 0
  %1207 = vmatpush1.bf16.msra.mxu0 0
  %1208 = vmatprep.subr.bf16.mxu0 0
  %1209 = vmatpush1.bf16.msra.mxu0 0
  %1210 = vmatprep.subr.bf16.mxu0 0
  %1211 = vmatpush1.bf16.msra.mxu0 0
  %1212 = vmatprep.subr.bf16.mxu0 0
  %1213 = vmatpush1.bf16.msra.mxu0 0
  %1214 = vmatprep.subr.bf16.mxu0 0
  %1215 = vmatpush1.bf16.msra.mxu0 0
  %1216 = vmatprep.mubr.bf16.mxu0 0
  %1217 = vmatmul.mubr.bf16.gmra.mrb[0].mxu0 %v1142
  %v1218 = vpop.f32.mrb[0].mxu0
  %v1219 = vadd.f32 %v333, %v1218
  %v1220 = vpop.f32.mrb[0].mxu0
  %v1221 = vpop.f32.mrb[0].mxu0
  %v1222 = vpop.f32.mrb[0].mxu0
  %1223 = vdwg.mxu0
  %v1224 = vadd.f32 %v1139, %v1178
  %v1225 = vxor.u32 %v1224, 2147483648
  %v1226 = vmul.f32 %v1225, 1.442695
  %v1227 = vpow.pop %v1226
  %v1228 = vadd.f32 %v1227, 1.0
  %v1229 = vrcp.pop %v1228
  %v1230 = vmul.f32 1.0, %v1229
  %v1231 = vadd.f32 %v1140, %v1180
  %v1232 = vxor.u32 %v1231, 2147483648
  %v1233 = vmul.f32 %v1232, 1.442695
  %v1234 = vpow.pop %v1233
  %v1235 = vadd.f32 %v1234, 1.0
  %v1236 = vrcp.pop %v1235
  %v1237 = vmul.f32 1.0, %v1236
  %v1238 = vmul.f32 %v1230, %v1219
  %v1239 = vadd.f32 %v1141, %v1238
  %v1240 = vtanh.pop %v1239
  %v1241 = vsub.f32 1.0, %v1237
  %v1242 = vmul.f32 %v1241, %v1240
  %v1243 = vmul.f32 %v1237, %v1131
  %v1244 = vadd.f32 %v1242, %v1243
  %vm1245 = vcmp.eq.s32.totalorder %v284, 6
  %v1246 = vsel %vm1245, 1, 0
  %1247 = vset.pattern.permute.xlu0 0
  %1248 = vperm.xlu0 %1247, %v1246
  %v1249 = vpop.permute.xlu0 %1248
  %vm1250 = vcmp.eq.s32.totalorder %v1249, 1
  %v1251 = vsel %vm1250, %v1244, %v1138
  %v1252 = vld [vmem:[#allocation2 + $0xa8] sm:$0xff]
  %v1253 = vld [vmem:[#allocation2 + $0xb0] sm:$0xff]
  %v1254 = vld [vmem:[#allocation2 + $0xb8] sm:$0xff]
  %v1255 = vpack.c.bf16 %v1244, %v1244
  %1256 = vmatprep.subr.bf16.mxu0 %v418
  %1257 = vmatpush1.bf16.msra.mxu0 %v417
  %1258 = vmatprep.subr.bf16.mxu0 %v421
  %1259 = vmatpush1.bf16.msra.mxu0 %v420
  %1260 = vmatprep.subr.bf16.mxu0 %v424
  %1261 = vmatpush1.bf16.msra.mxu0 %v423
  %1262 = vmatprep.subr.bf16.mxu0 %v427
  %1263 = vmatpush1.bf16.msra.mxu0 %v426
  %1264 = vmatprep.subr.bf16.mxu0 %v430
  %1265 = vmatpush1.bf16.msra.mxu0 %v429
  %1266 = vmatprep.subr.bf16.mxu0 %v433
  %1267 = vmatpush1.bf16.msra.mxu0 %v432
  %1268 = vmatprep.subr.bf16.mxu0 %v436
  %1269 = vmatpush1.bf16.msra.mxu0 %v435
  %1270 = vmatprep.subr.bf16.mxu0 %v439
  %1271 = vmatpush1.bf16.msra.mxu0 %v438
  %1272 = vmatprep.subr.bf16.mxu0 0
  %1273 = vmatpush1.bf16.msra.mxu0 0
  %1274 = vmatprep.subr.bf16.mxu0 0
  %1275 = vmatpush1.bf16.msra.mxu0 0
  %1276 = vmatprep.subr.bf16.mxu0 0
  %1277 = vmatpush1.bf16.msra.mxu0 0
  %1278 = vmatprep.subr.bf16.mxu0 0
  %1279 = vmatpush1.bf16.msra.mxu0 0
  %1280 = vmatprep.subr.bf16.mxu0 0
  %1281 = vmatpush1.bf16.msra.mxu0 0
  %1282 = vmatprep.subr.bf16.mxu0 0
  %1283 = vmatpush1.bf16.msra.mxu0 0
  %1284 = vmatprep.subr.bf16.mxu0 0
  %1285 = vmatpush1.bf16.msra.mxu0 0
  %1286 = vmatprep.subr.bf16.mxu0 0
  %1287 = vmatpush1.bf16.msra.mxu0 0
  %1288 = vmatprep.mubr.bf16.mxu0 0
  %1289 = vmatmul.mubr.bf16.gmra.mrb[0].mxu0 %v1255
  %v1290 = vpop.f32.mrb[0].mxu0
  %v1291 = vadd.f32 %v325, %v1290
  %v1292 = vpop.f32.mrb[0].mxu0
  %v1293 = vadd.f32 %v329, %v1292
  %v1294 = vpop.f32.mrb[0].mxu0
  %v1295 = vpop.f32.mrb[0].mxu0
  %1296 = vdwg.mxu0
  %1297 = vmatprep.subr.bf16.mxu0 0
  %1298 = vmatpush1.bf16.msra.mxu0 %v419
  %1299 = vmatprep.subr.bf16.mxu0 0
  %1300 = vmatpush1.bf16.msra.mxu0 %v422
  %1301 = vmatprep.subr.bf16.mxu0 0
  %1302 = vmatpush1.bf16.msra.mxu0 %v425
  %1303 = vmatprep.subr.bf16.mxu0 0
  %1304 = vmatpush1.bf16.msra.mxu0 %v428
  %1305 = vmatprep.subr.bf16.mxu0 0
  %1306 = vmatpush1.bf16.msra.mxu0 %v431
  %1307 = vmatprep.subr.bf16.mxu0 0
  %1308 = vmatpush1.bf16.msra.mxu0 %v434
  %1309 = vmatprep.subr.bf16.mxu0 0
  %1310 = vmatpush1.bf16.msra.mxu0 %v437
  %1311 = vmatprep.subr.bf16.mxu0 0
  %1312 = vmatpush1.bf16.msra.mxu0 %v440
  %1313 = vmatprep.subr.bf16.mxu0 0
  %1314 = vmatpush1.bf16.msra.mxu0 0
  %1315 = vmatprep.subr.bf16.mxu0 0
  %1316 = vmatpush1.bf16.msra.mxu0 0
  %1317 = vmatprep.subr.bf16.mxu0 0
  %1318 = vmatpush1.bf16.msra.mxu0 0
  %1319 = vmatprep.subr.bf16.mxu0 0
  %1320 = vmatpush1.bf16.msra.mxu0 0
  %1321 = vmatprep.subr.bf16.mxu0 0
  %1322 = vmatpush1.bf16.msra.mxu0 0
  %1323 = vmatprep.subr.bf16.mxu0 0
  %1324 = vmatpush1.bf16.msra.mxu0 0
  %1325 = vmatprep.subr.bf16.mxu0 0
  %1326 = vmatpush1.bf16.msra.mxu0 0
  %1327 = vmatprep.subr.bf16.mxu0 0
  %1328 = vmatpush1.bf16.msra.mxu0 0
  %1329 = vmatprep.mubr.bf16.mxu0 0
  %1330 = vmatmul.mubr.bf16.gmra.mrb[0].mxu0 %v1255
  %v1331 = vpop.f32.mrb[0].mxu0
  %v1332 = vadd.f32 %v333, %v1331
  %v1333 = vpop.f32.mrb[0].mxu0
  %v1334 = vpop.f32.mrb[0].mxu0
  %v1335 = vpop.f32.mrb[0].mxu0
  %1336 = vdwg.mxu0
  %v1337 = vadd.f32 %v1252, %v1291
  %v1338 = vxor.u32 %v1337, 2147483648
  %v1339 = vmul.f32 %v1338, 1.442695
  %v1340 = vpow.pop %v1339
  %v1341 = vadd.f32 %v1340, 1.0
  %v1342 = vrcp.pop %v1341
  %v1343 = vmul.f32 1.0, %v1342
  %v1344 = vadd.f32 %v1253, %v1293
  %v1345 = vxor.u32 %v1344, 2147483648
  %v1346 = vmul.f32 %v1345, 1.442695
  %v1347 = vpow.pop %v1346
  %v1348 = vadd.f32 %v1347, 1.0
  %v1349 = vrcp.pop %v1348
  %v1350 = vmul.f32 1.0, %v1349
  %v1351 = vmul.f32 %v1343, %v1332
  %v1352 = vadd.f32 %v1254, %v1351
  %v1353 = vtanh.pop %v1352
  %v1354 = vsub.f32 1.0, %v1350
  %v1355 = vmul.f32 %v1354, %v1353
  %v1356 = vmul.f32 %v1350, %v1244
  %v1357 = vadd.f32 %v1355, %v1356
  %vm1358 = vcmp.eq.s32.totalorder %v284, 7
  %v1359 = vsel %vm1358, 1, 0
  %1360 = vset.pattern.permute.xlu0 0
  %1361 = vperm.xlu0 %1360, %v1359
  %v1362 = vpop.permute.xlu0 %1361
  %vm1363 = vcmp.eq.s32.totalorder %v1362, 1
  %v1364 = vsel %vm1363, %v1357, %v1251
  %1365 = vst [vmem:[%s6] sm:$0xff] %v1364
  // Predicated region
  $region26: #{encoder_rnn_forward.1} parent=0 // pred_check
    _
  $region27: #{encoder_rnn_forward.1} parent=0 // pred_check_branch
    %1367 = sbr.rel (0) target = $region29
  $region28: #{encoder_rnn_forward.1} parent=0 // pred_region
    _
  $region29: #{encoder_rnn_forward.1} parent=0 // pred_fallthru
    _
  // Predicated region
  $region30: #{encoder_rnn_forward.1} parent=0 // pred_check
    _
  $region31: #{encoder_rnn_forward.1} parent=0 // pred_check_branch
    %1369 = sbr.rel (0) target = $region33
  $region32: #{encoder_rnn_forward.1} parent=0 // pred_region
    _
  $region33: #{encoder_rnn_forward.1} parent=0 // pred_fallthru
    _

</llo_original>
